<compile_context>
chip_gen: v7x
topology: tpu7x:2x2x1
jax: 0.10.0
libtpu: 0.0.40
codegen_flags: <defaults>
</compile_context>

<pallas_src>
import functools

import jax
import jax.numpy as jnp
from jax.experimental import pallas as pl
from jax.experimental.pallas import tpu as pltpu


def _static_l0_avwgcn_kernel(x_ref, emb_ref, wp_ref, bpool_ref,
                             gamma_ref, beta_ref, out_ref, *, cheb_k):
    # Per grid step b:
    #   x_ref    : [1, N, I]        out_ref : [1, N, O]
    #   emb_ref  : [N, D]           wp_ref  : [K*I, D, O]   (wrapper-prepared)
    #   bpool_ref: [D, O]           gamma/beta : [1, D]
    emb = emb_ref[...].astype(jnp.float32)
    gamma = gamma_ref[...].astype(jnp.float32)
    beta = beta_ref[...].astype(jnp.float32)

    # LayerNorm(embed_dim, eps=1e-12). Dropout(0.1) is identity in eval mode.
    # TODO(synk): training-mode dropout (random mask) intentionally omitted.
    mean = jnp.mean(emb, axis=-1, keepdims=True)
    var = jnp.mean((emb - mean) ** 2, axis=-1, keepdims=True)
    e = (emb - mean) * jax.lax.rsqrt(var + 1e-12) * gamma + beta           # [N, D]

    # supports = softmax(relu(E E^T), dim=1)
    # TODO(synk): optional `mask` argument of forward (default None) not implemented.
    s = jnp.dot(e, e.T, preferred_element_type=jnp.float32)                # [N, N]
    s = jnp.maximum(s, 0.0)
    s = jnp.exp(s - jnp.max(s, axis=1, keepdims=True))
    supports = s / jnp.sum(s, axis=1, keepdims=True)                       # [N, N]

    # Chebyshev recursion on propagated features: x_k = T_k(A) @ x, built as
    #   x_0 = x,  x_1 = A x,  x_k = 2 A x_{k-1} - x_{k-2}
    # (never materializes T_k(A): no eye, no K resident [N, N] buffers).
    xb = x_ref[0, :, :].astype(jnp.float32)                                # [N, I]
    feats = [xb]
    if cheb_k >= 2:
        xk_prev = xb
        xk = jnp.dot(supports, xb, preferred_element_type=jnp.float32)
        feats.append(xk)
        for _ in range(2, cheb_k):
            xk_prev, xk = xk, (
                2.0 * jnp.dot(supports, xk, preferred_element_type=jnp.float32)
                - xk_prev)
            feats.append(xk)
    xg = jnp.concatenate(feats, axis=-1)                                   # [N, K*I], k-major

    # Fused MXU contraction over (k, i):
    #   Z[n, d, o] = sum_{ki} xg[n, ki] * wp[ki, d, o]
    z = jnp.einsum('nr,rdo->ndo', xg, wp_ref[...].astype(jnp.float32),
                   preferred_element_type=jnp.float32)                     # [N, D, O]

    # Per-node weight generation folded into a small d-weighted reduce:
    #   out[n, o] = sum_d e[n, d] * Z[n, d, o] + (e @ bias_pool)[n, o]
    bias = jnp.dot(e, bpool_ref[...].astype(jnp.float32),
                   preferred_element_type=jnp.float32)                     # [N, O]
    out = jnp.sum(z * e[:, :, None], axis=1) + bias                        # [N, O]
    out_ref[0, :, :] = out.astype(out_ref.dtype)


def static_l0_avwgcn(x, node_embeddings, weights_pool, bias_pool,
                     ln_gamma, ln_beta, cheb_k):
    B, N, dim_in = x.shape
    embed_dim, _, _, dim_out = weights_pool.shape

    # Hoisted wrapper-side: wp[k*I + i, d, o] = weights_pool[d, k, i, o], so the kernel
    # sees one contiguous [K*I, D, O] operand (no strided 4-D slicing in-kernel).
    wp = jnp.transpose(weights_pool, (1, 2, 0, 3)).reshape(
        cheb_k * dim_in, embed_dim, dim_out)

    kernel = functools.partial(_static_l0_avwgcn_kernel, cheb_k=cheb_k)

    def full(shape):
        return pl.BlockSpec(shape, lambda b: (0,) * len(shape))

    return pl.pallas_call(
        kernel,
        out_shape=jax.ShapeDtypeStruct((B, N, dim_out), jnp.float32),
        grid=(B,),
        in_specs=[
            pl.BlockSpec((1, N, dim_in), lambda b: (b, 0, 0)),   # x: one batch row / step
            full((N, embed_dim)),                                # node embeddings
            full((cheb_k * dim_in, embed_dim, dim_out)),         # fused weight pool
            full((embed_dim, dim_out)),                          # bias pool
            full((1, embed_dim)),                                # LN gamma
            full((1, embed_dim)),                                # LN beta
        ],
        out_specs=pl.BlockSpec((1, N, dim_out), lambda b: (b, 0, 0)),
        compiler_params=pltpu.CompilerParams(
            dimension_semantics=("parallel",)),                  # both TCs on v7x
    )(x, node_embeddings, wp, bias_pool, ln_gamma, ln_beta)


def _reference(x, node_embeddings, weights_pool, bias_pool, ln_gamma, ln_beta, cheb_k):
    # Pure-JAX mirror of the PyTorch forward (eval mode, mask=None).
    mean = jnp.mean(node_embeddings, axis=-1, keepdims=True)
    var = jnp.mean((node_embeddings - mean) ** 2, axis=-1, keepdims=True)
    e = (node_embeddings - mean) / jnp.sqrt(var + 1e-12) * ln_gamma[0] + ln_beta[0]
    supports = jax.nn.softmax(jax.nn.relu(e @ e.T), axis=1)
    n = supports.shape[0]
    support_set = [jnp.eye(n, dtype=jnp.float32), supports]
    for _ in range(2, cheb_k):
        support_set.append(2.0 * supports @ support_set[-1] - support_set[-2])
    supports = jnp.stack(support_set, axis=0)
    weights = jnp.einsum('nd,dkio->nkio', e, weights_pool)
    bias = e @ bias_pool
    x_g = jnp.einsum('knm,bmc->bknc', supports, x)
    x_g = jnp.transpose(x_g, (0, 2, 1, 3))
    return jnp.einsum('bnki,nkio->bno', x_g, weights) + bias


if __name__ == "__main__":
    B, N, dim_in, dim_out, cheb_k, embed_dim = 2, 16, 4, 8, 3, 8

    key = jax.random.PRNGKey(0)
    kx, ke, kw, kb = jax.random.split(key, 4)
    x = jax.random.normal(kx, (B, N, dim_in), dtype=jnp.float32)
    node_embeddings = jax.random.normal(ke, (N, embed_dim), dtype=jnp.float32)
    # Deterministic synthetic parameters (the PyTorch module leaves them uninitialized).
    weights_pool = 0.1 * jax.random.normal(kw, (embed_dim, cheb_k, dim_in, dim_out),
                                           dtype=jnp.float32)
    bias_pool = 0.1 * jax.random.normal(kb, (embed_dim, dim_out), dtype=jnp.float32)
    ln_gamma = jnp.ones((1, embed_dim), dtype=jnp.float32)   # nn.LayerNorm default weight
    ln_beta = jnp.zeros((1, embed_dim), dtype=jnp.float32)   # nn.LayerNorm default bias

    out = static_l0_avwgcn(x, node_embeddings, weights_pool, bias_pool,
                           ln_gamma, ln_beta, cheb_k)
    out = jax.block_until_ready(out)

    ref = _reference(x, node_embeddings, weights_pool, bias_pool,
                     ln_gamma, ln_beta, cheb_k)
    assert out.shape == (B, N, dim_out)
    assert jnp.allclose(out, ref, rtol=1e-4, atol=1e-4), "mismatch vs JAX reference"

    print("KERNEL_OK")
</pallas_src>

<mosaic_0001>
module attributes {stable_mosaic.version = 11 : i64} {
  func.func @_static_l0_avwgcn_kernel(%arg0: i32, %arg1: memref<1x16x4xf32, #tpu.memory_space<vmem>>, %arg2: memref<16x8xf32, #tpu.memory_space<vmem>>, %arg3: memref<12x8x8xf32, #tpu.memory_space<vmem>>, %arg4: memref<8x8xf32, #tpu.memory_space<vmem>>, %arg5: memref<1x8xf32, #tpu.memory_space<vmem>>, %arg6: memref<1x8xf32, #tpu.memory_space<vmem>>, %arg7: memref<1x16x8xf32, #tpu.memory_space<vmem>>) attributes {dimension_semantics = [#tpu.dimension_semantics<parallel>], iteration_bounds = array<i64: 2>, scalar_prefetch = 0 : i64, scratch_operands = 0 : i64, tpu.core_type = #tpu.core_type<tc>, window_params = [{transform_indices = @transform_0, window_bounds = array<i64: 1, 16, 4>}, {pipeline_mode = #tpu.pipeline_mode<synchronous>, transform_indices = @transform_1, window_bounds = array<i64: 16, 8>}, {pipeline_mode = #tpu.pipeline_mode<synchronous>, transform_indices = @transform_2, window_bounds = array<i64: 12, 8, 8>}, {pipeline_mode = #tpu.pipeline_mode<synchronous>, transform_indices = @transform_3, window_bounds = array<i64: 8, 8>}, {pipeline_mode = #tpu.pipeline_mode<synchronous>, transform_indices = @transform_4, window_bounds = array<i64: 1, 8>}, {pipeline_mode = #tpu.pipeline_mode<synchronous>, transform_indices = @transform_5, window_bounds = array<i64: 1, 8>}, {transform_indices = @transform_6, window_bounds = array<i64: 1, 16, 8>}]} {
    %c0 = arith.constant 0 : index
    %c0_0 = arith.constant 0 : index
    %0 = vector.load %arg2[%c0, %c0_0] : memref<16x8xf32, #tpu.memory_space<vmem>>, vector<16x8xf32>
    %c0_1 = arith.constant 0 : index
    %c0_2 = arith.constant 0 : index
    %1 = vector.load %arg5[%c0_1, %c0_2] : memref<1x8xf32, #tpu.memory_space<vmem>>, vector<1x8xf32>
    %c0_3 = arith.constant 0 : index
    %c0_4 = arith.constant 0 : index
    %2 = vector.load %arg6[%c0_3, %c0_4] : memref<1x8xf32, #tpu.memory_space<vmem>>, vector<1x8xf32>
    %cst = arith.constant dense<0.000000e+00> : vector<16xf32>
    %3 = vector.multi_reduction <add>, %0, %cst [1] : vector<16x8xf32> to vector<16xf32>
    %4 = vector.shape_cast %3 : vector<16xf32> to vector<16x1xf32>
    %cst_5 = arith.constant 8.000000e+00 : f32
    %5 = vector.broadcast %cst_5 : f32 to vector<16x1xf32>
    %6 = arith.divf %4, %5 : vector<16x1xf32>
    %7 = vector.broadcast %6 : vector<16x1xf32> to vector<16x8xf32>
    %8 = arith.subf %0, %7 : vector<16x8xf32>
    %9 = arith.mulf %8, %8 : vector<16x8xf32>
    %cst_6 = arith.constant dense<0.000000e+00> : vector<16xf32>
    %10 = vector.multi_reduction <add>, %9, %cst_6 [1] : vector<16x8xf32> to vector<16xf32>
    %11 = vector.shape_cast %10 : vector<16xf32> to vector<16x1xf32>
    %cst_7 = arith.constant 8.000000e+00 : f32
    %12 = vector.broadcast %cst_7 : f32 to vector<16x1xf32>
    %13 = arith.divf %11, %12 : vector<16x1xf32>
    %14 = vector.broadcast %6 : vector<16x1xf32> to vector<16x8xf32>
    %15 = arith.subf %0, %14 : vector<16x8xf32>
    %cst_8 = arith.constant 9.99999996E-13 : f32
    %16 = vector.broadcast %cst_8 : f32 to vector<16x1xf32>
    %17 = arith.addf %13, %16 : vector<16x1xf32>
    %18 = math.rsqrt %17 : vector<16x1xf32>
    %19 = vector.broadcast %18 : vector<16x1xf32> to vector<16x8xf32>
    %20 = arith.mulf %15, %19 : vector<16x8xf32>
    %21 = vector.broadcast %1 : vector<1x8xf32> to vector<16x8xf32>
    %22 = arith.mulf %20, %21 : vector<16x8xf32>
    %23 = vector.broadcast %2 : vector<1x8xf32> to vector<16x8xf32>
    %24 = arith.addf %22, %23 : vector<16x8xf32>
    %25 = tpu.transpose %24, [1, 0] : vector<16x8xf32> -> vector<8x16xf32>
    %cst_9 = arith.constant dense<0.000000e+00> : vector<16x16xf32>
    %26 = tpu.matmul %24, %25, %cst_9 {dimension_numbers = #tpu.dot_dimension_numbers<[1], [0], [0], [1], [0, 0, 1, 1], [], []>} : vector<16x8xf32>, vector<8x16xf32>, vector<16x16xf32> -> vector<16x16xf32>
    %cst_10 = arith.constant 0.000000e+00 : f32
    %27 = vector.broadcast %cst_10 : f32 to vector<16x16xf32>
    %28 = arith.maximumf %26, %27 : vector<16x16xf32>
    %cst_11 = arith.constant dense<0xFF800000> : vector<16xf32>
    %29 = vector.multi_reduction <maximumf>, %28, %cst_11 [1] : vector<16x16xf32> to vector<16xf32>
    %30 = vector.shape_cast %29 : vector<16xf32> to vector<16x1xf32>
    %31 = vector.broadcast %30 : vector<16x1xf32> to vector<16x16xf32>
    %32 = arith.subf %28, %31 : vector<16x16xf32>
    %33 = math.exp %32 : vector<16x16xf32>
    %cst_12 = arith.constant dense<0.000000e+00> : vector<16xf32>
    %34 = vector.multi_reduction <add>, %33, %cst_12 [1] : vector<16x16xf32> to vector<16xf32>
    %35 = vector.shape_cast %34 : vector<16xf32> to vector<16x1xf32>
    %36 = vector.broadcast %35 : vector<16x1xf32> to vector<16x16xf32>
    %37 = arith.divf %33, %36 : vector<16x16xf32>
    %c0_13 = arith.constant 0 : index
    %c0_14 = arith.constant 0 : index
    %c0_15 = arith.constant 0 : index
    %38 = vector.load %arg1[%c0_13, %c0_14, %c0_15] : memref<1x16x4xf32, #tpu.memory_space<vmem>>, vector<1x16x4xf32>
    %39 = vector.shape_cast %38 : vector<1x16x4xf32> to vector<16x4xf32>
    %cst_16 = arith.constant dense<0.000000e+00> : vector<16x4xf32>
    %40 = tpu.matmul %37, %39, %cst_16 {dimension_numbers = #tpu.dot_dimension_numbers<[1], [0], [0], [1], [0, 0, 1, 1], [], []>} : vector<16x16xf32>, vector<16x4xf32>, vector<16x4xf32> -> vector<16x4xf32>
    %cst_17 = arith.constant dense<0.000000e+00> : vector<16x4xf32>
    %41 = tpu.matmul %37, %40, %cst_17 {dimension_numbers = #tpu.dot_dimension_numbers<[1], [0], [0], [1], [0, 0, 1, 1], [], []>} : vector<16x16xf32>, vector<16x4xf32>, vector<16x4xf32> -> vector<16x4xf32>
    %cst_18 = arith.constant 2.000000e+00 : f32
    %42 = vector.broadcast %cst_18 : f32 to vector<16x4xf32>
    %43 = arith.mulf %42, %41 : vector<16x4xf32>
    %44 = arith.subf %43, %39 : vector<16x4xf32>
    %45 = tpu.concatenate %39, %40, %44 in 1 : vector<16x4xf32>, vector<16x4xf32>, vector<16x4xf32> -> vector<16x12xf32>
    %c0_19 = arith.constant 0 : index
    %c0_20 = arith.constant 0 : index
    %c0_21 = arith.constant 0 : index
    %46 = vector.load %arg3[%c0_19, %c0_20, %c0_21] : memref<12x8x8xf32, #tpu.memory_space<vmem>>, vector<12x8x8xf32>
    "tpu.trace_start"() <{level = 10 : i32, message = "nr,rdo->ndo"}> : () -> ()
    %cst_22 = arith.constant dense<0.000000e+00> : vector<16x8x8xf32>
    %47 = tpu.matmul %45, %46, %cst_22 {dimension_numbers = #tpu.dot_dimension_numbers<[1], [0], [0], [1, 2], [0, 0, 1, 1, 1, 2], [], []>} : vector<16x12xf32>, vector<12x8x8xf32>, vector<16x8x8xf32> -> vector<16x8x8xf32>
    "tpu.trace_stop"() : () -> ()
    %c0_23 = arith.constant 0 : index
    %c0_24 = arith.constant 0 : index
    %48 = vector.load %arg4[%c0_23, %c0_24] : memref<8x8xf32, #tpu.memory_space<vmem>>, vector<8x8xf32>
    %cst_25 = arith.constant dense<0.000000e+00> : vector<16x8xf32>
    %49 = tpu.matmul %24, %48, %cst_25 {dimension_numbers = #tpu.dot_dimension_numbers<[1], [0], [0], [1], [0, 0, 1, 1], [], []>} : vector<16x8xf32>, vector<8x8xf32>, vector<16x8xf32> -> vector<16x8xf32>
    %50 = vector.shape_cast %24 : vector<16x8xf32> to vector<16x8x1xf32>
    %51 = vector.broadcast %50 : vector<16x8x1xf32> to vector<16x8x8xf32>
    %52 = arith.mulf %47, %51 : vector<16x8x8xf32>
    %cst_26 = arith.constant dense<0.000000e+00> : vector<16x8xf32>
    %53 = vector.multi_reduction <add>, %52, %cst_26 [1] : vector<16x8x8xf32> to vector<16x8xf32>
    %54 = arith.addf %53, %49 : vector<16x8xf32>
    %c0_27 = arith.constant 0 : index
    %c0_28 = arith.constant 0 : index
    %c0_29 = arith.constant 0 : index
    %55 = vector.load %arg7[%c0_27, %c0_28, %c0_29] : memref<1x16x8xf32, #tpu.memory_space<vmem>>, vector<1x16x8xf32>
    %56 = vector.shape_cast %55 : vector<1x16x8xf32> to vector<16x8xf32>
    %57 = vector.shape_cast %54 : vector<16x8xf32> to vector<1x16x8xf32>
    tpu.vector_store %arg7[%c0_27, %c0_28, %c0_29], %57 {strides = array<i32>} : memref<1x16x8xf32, #tpu.memory_space<vmem>>, vector<1x16x8xf32>,
    return
  }
  func.func @transform_0(%arg0: i32) -> (i32, i32, i32) {
    %c0_i32 = arith.constant 0 : i32
    %c0_i32_0 = arith.constant 0 : i32
    %c0_i32_1 = arith.constant 0 : i32
    return %arg0, %c0_i32, %c0_i32_0 : i32, i32, i32
  }
  func.func @transform_1(%arg0: i32) -> (i32, i32) {
    %c0_i32 = arith.constant 0 : i32
    %c0_i32_0 = arith.constant 0 : i32
    %c0_i32_1 = arith.constant 0 : i32
    return %c0_i32, %c0_i32_0 : i32, i32
  }
  func.func @transform_2(%arg0: i32) -> (i32, i32, i32) {
    %c0_i32 = arith.constant 0 : i32
    %c0_i32_0 = arith.constant 0 : i32
    %c0_i32_1 = arith.constant 0 : i32
    %c0_i32_2 = arith.constant 0 : i32
    return %c0_i32, %c0_i32_0, %c0_i32_1 : i32, i32, i32
  }
  func.func @transform_3(%arg0: i32) -> (i32, i32) {
    %c0_i32 = arith.constant 0 : i32
    %c0_i32_0 = arith.constant 0 : i32
    %c0_i32_1 = arith.constant 0 : i32
    return %c0_i32, %c0_i32_0 : i32, i32
  }
  func.func @transform_4(%arg0: i32) -> (i32, i32) {
    %c0_i32 = arith.constant 0 : i32
    %c0_i32_0 = arith.constant 0 : i32
    %c0_i32_1 = arith.constant 0 : i32
    return %c0_i32, %c0_i32_0 : i32, i32
  }
  func.func @transform_5(%arg0: i32) -> (i32, i32) {
    %c0_i32 = arith.constant 0 : i32
    %c0_i32_0 = arith.constant 0 : i32
    %c0_i32_1 = arith.constant 0 : i32
    return %c0_i32, %c0_i32_0 : i32, i32
  }
  func.func @transform_6(%arg0: i32) -> (i32, i32, i32) {
    %c0_i32 = arith.constant 0 : i32
    %c0_i32_0 = arith.constant 0 : i32
    %c0_i32_1 = arith.constant 0 : i32
    return %arg0, %c0_i32, %c0_i32_0 : i32, i32, i32
  }
}

</mosaic_0001>

<llo_original>
// kernel: tpu_custom_call.1
$region0: #{tpu_custom_call.1}
  #allocation0 [shape = 'u32[]', space=smem, size = 0x4, offset = 0x4, fixed_abs, tag = 'smem constant byte address 0x4 - core index']
  #allocation1 [shape = 'u32[144,128]{1,0:T(1,128)}', space=vmem, size = 0x12000, scoped, tag = 'internal scratch']
  %s0 = inlined_call_operand.vmem [shape: f32[2,16,4], index: 0, kind: input, shape index: {}]
  %s1 = inlined_call_operand.vmem [shape: f32[16,8], index: 1, kind: input, shape index: {}]
  %s2 = inlined_call_operand.vmem [shape: f32[12,8,8], index: 2, kind: input, shape index: {}]
  %s3 = inlined_call_operand.vmem [shape: f32[8,8], index: 3, kind: input, shape index: {}]
  %s4 = inlined_call_operand.vmem [shape: f32[1,8], index: 4, kind: input, shape index: {}]
  %s5 = inlined_call_operand.vmem [shape: f32[1,8], index: 5, kind: input, shape index: {}]
  %s6 = inlined_call_operand.vmem [shape: f32[2,16,8], index: 6, kind: output, shape index: {}]
  %s7 = sld [smem:[#allocation0]]
  $region57: #{tpu_custom_call.1} parent=0
    _
  %s9 = ssub.s32 1, %s7
  %s10 = scalar_select 0, %s9, %s7
  loop: start=0, step=1, limit=4
  $region2: #{tpu_custom_call.1} parent=0 // loop_pre_header
    _
  $region3: #{tpu_custom_call.1} parent=0 // loop_header
    %s12 = sphi 0, %s16
    %p13 = scmp.ge.s32.totalorder %s12, 4
    %s22 = sphi 0, %s24
    %s25 = sphi 0, %s22
    %s26 = sphi 0, %s25
    %s42 = sphi 0, %s26
    %s46 = sphi 0, %s46
    %s48 = sphi 0, %s46
    %s49 = sphi 0, %s48
    %s63 = sphi 0, %s49
    %s67 = sphi 0, %s67
    %s69 = sphi 0, %s67
    %s70 = sphi 0, %s69
    %s84 = sphi 0, %s70
    %s88 = sphi 0, %s88
    %s90 = sphi 0, %s88
    %s91 = sphi 0, %s90
    %s105 = sphi 0, %s91
    %s109 = sphi 0, %s109
    %s111 = sphi 0, %s109
    %s112 = sphi 0, %s111
    %s126 = sphi 0, %s112
    %s130 = sphi 0, %s130
    %s132 = sphi 0, %s130
    %s133 = sphi 0, %s132
    %s147 = sphi 0, %s133
    %s153 = sphi 0, %s155
    %s156 = sphi 0, %s153
    %s157 = sphi 0, %s156
    %s173 = sphi 0, %s157
  $region4: #{tpu_custom_call.1} parent=0 // loop_header_branch
    %15 = sbr.rel (%p13) target = $region8
  $region5: #{tpu_custom_call.1} parent=0 // loop_body
    %s17 = ssub.s32 %s12, 1
    %s18 = ssub.s32 %s12, 2
    %s19 = sadd.s32 %s12, 1
    %s20 = ssub.s32 %s12, %s19
    %p21 = scmp.eq.s32.totalorder %s20, 0
    %s23 = sadd.s32 %s22, 1
    %s24 = scalar_select %p21, %s22, %s23
    %p27 = pneg %p21
    %p28 = scmp.eq.s32.totalorder %s12, 1
    %p29 = por %p27, %p28
    %p30 = scmp.ne.s32.totalorder %s22, %s25
    %p31 = scmp.eq.s32.totalorder %s12, 0
    %p32 = por %p30, %p31
    %p33 = scmp.ne.s32.totalorder %s22, %s25
    %p34 = scmp.eq.s32.totalorder %s17, 1
    %p35 = por %p33, %p34
    %p36 = scmp.ne.s32.totalorder %s25, %s26
    %p37 = scmp.eq.s32.totalorder %s17, 0
    %p38 = por %p36, %p37
    %p39 = scmp.ne.s32.totalorder %s25, %s26
    %p40 = scmp.eq.s32.totalorder %s18, 1
    %p41 = por %p39, %p40
    %p43 = scmp.ne.s32.totalorder %s26, %s42
    %p44 = scmp.eq.s32.totalorder %s18, 0
    %p45 = por %p43, %p44
    %s47 = sadd.s32 %s46, 1
    %p50 = scmp.eq.s32.totalorder %s12, 1
    %p51 = scmp.ne.s32.totalorder %s46, %s48
    %p52 = scmp.eq.s32.totalorder %s12, 0
    %p53 = por %p51, %p52
    %p54 = scmp.ne.s32.totalorder %s46, %s48
    %p55 = scmp.eq.s32.totalorder %s17, 1
    %p56 = por %p54, %p55
    %p57 = scmp.ne.s32.totalorder %s48, %s49
    %p58 = scmp.eq.s32.totalorder %s17, 0
    %p59 = por %p57, %p58
    %p60 = scmp.ne.s32.totalorder %s48, %s49
    %p61 = scmp.eq.s32.totalorder %s18, 1
    %p62 = por %p60, %p61
    %p64 = scmp.ne.s32.totalorder %s49, %s63
    %p65 = scmp.eq.s32.totalorder %s18, 0
    %p66 = por %p64, %p65
    %s68 = sadd.s32 %s67, 1
    %p71 = scmp.eq.s32.totalorder %s12, 1
    %p72 = scmp.ne.s32.totalorder %s67, %s69
    %p73 = scmp.eq.s32.totalorder %s12, 0
    %p74 = por %p72, %p73
    %p75 = scmp.ne.s32.totalorder %s67, %s69
    %p76 = scmp.eq.s32.totalorder %s17, 1
    %p77 = por %p75, %p76
    %p78 = scmp.ne.s32.totalorder %s69, %s70
    %p79 = scmp.eq.s32.totalorder %s17, 0
    %p80 = por %p78, %p79
    %p81 = scmp.ne.s32.totalorder %s69, %s70
    %p82 = scmp.eq.s32.totalorder %s18, 1
    %p83 = por %p81, %p82
    %p85 = scmp.ne.s32.totalorder %s70, %s84
    %p86 = scmp.eq.s32.totalorder %s18, 0
    %p87 = por %p85, %p86
    %s89 = sadd.s32 %s88, 1
    %p92 = scmp.eq.s32.totalorder %s12, 1
    %p93 = scmp.ne.s32.totalorder %s88, %s90
    %p94 = scmp.eq.s32.totalorder %s12, 0
    %p95 = por %p93, %p94
    %p96 = scmp.ne.s32.totalorder %s88, %s90
    %p97 = scmp.eq.s32.totalorder %s17, 1
    %p98 = por %p96, %p97
    %p99 = scmp.ne.s32.totalorder %s90, %s91
    %p100 = scmp.eq.s32.totalorder %s17, 0
    %p101 = por %p99, %p100
    %p102 = scmp.ne.s32.totalorder %s90, %s91
    %p103 = scmp.eq.s32.totalorder %s18, 1
    %p104 = por %p102, %p103
    %p106 = scmp.ne.s32.totalorder %s91, %s105
    %p107 = scmp.eq.s32.totalorder %s18, 0
    %p108 = por %p106, %p107
    %s110 = sadd.s32 %s109, 1
    %p113 = scmp.eq.s32.totalorder %s12, 1
    %p114 = scmp.ne.s32.totalorder %s109, %s111
    %p115 = scmp.eq.s32.totalorder %s12, 0
    %p116 = por %p114, %p115
    %p117 = scmp.ne.s32.totalorder %s109, %s111
    %p118 = scmp.eq.s32.totalorder %s17, 1
    %p119 = por %p117, %p118
    %p120 = scmp.ne.s32.totalorder %s111, %s112
    %p121 = scmp.eq.s32.totalorder %s17, 0
    %p122 = por %p120, %p121
    %p123 = scmp.ne.s32.totalorder %s111, %s112
    %p124 = scmp.eq.s32.totalorder %s18, 1
    %p125 = por %p123, %p124
    %p127 = scmp.ne.s32.totalorder %s112, %s126
    %p128 = scmp.eq.s32.totalorder %s18, 0
    %p129 = por %p127, %p128
    %s131 = sadd.s32 %s130, 1
    %p134 = scmp.eq.s32.totalorder %s12, 1
    %p135 = scmp.ne.s32.totalorder %s130, %s132
    %p136 = scmp.eq.s32.totalorder %s12, 0
    %p137 = por %p135, %p136
    %p138 = scmp.ne.s32.totalorder %s130, %s132
    %p139 = scmp.eq.s32.totalorder %s17, 1
    %p140 = por %p138, %p139
    %p141 = scmp.ne.s32.totalorder %s132, %s133
    %p142 = scmp.eq.s32.totalorder %s17, 0
    %p143 = por %p141, %p142
    %p144 = scmp.ne.s32.totalorder %s132, %s133
    %p145 = scmp.eq.s32.totalorder %s18, 1
    %p146 = por %p144, %p145
    %p148 = scmp.ne.s32.totalorder %s133, %s147
    %p149 = scmp.eq.s32.totalorder %s18, 0
    %p150 = por %p148, %p149
    %s151 = ssub.s32 %s12, %s19
    %p152 = scmp.eq.s32.totalorder %s151, 0
    %s154 = sadd.s32 %s153, 1
    %s155 = scalar_select %p152, %s153, %s154
    %p158 = pneg %p152
    %p159 = scmp.eq.s32.totalorder %s12, 1
    %p160 = por %p158, %p159
    %p161 = scmp.ne.s32.totalorder %s153, %s156
    %p162 = scmp.eq.s32.totalorder %s12, 0
    %p163 = por %p161, %p162
    %p164 = scmp.ne.s32.totalorder %s153, %s156
    %p165 = scmp.eq.s32.totalorder %s17, 1
    %p166 = por %p164, %p165
    %p167 = scmp.ne.s32.totalorder %s156, %s157
    %p168 = scmp.eq.s32.totalorder %s17, 0
    %p169 = por %p167, %p168
    %p170 = scmp.ne.s32.totalorder %s156, %s157
    %p171 = scmp.eq.s32.totalorder %s18, 1
    %p172 = por %p170, %p171
    %p174 = scmp.ne.s32.totalorder %s157, %s173
    %p175 = scmp.eq.s32.totalorder %s18, 0
    %p176 = por %p174, %p175
    %p177 = scmp.le.s32.totalorder 1, %s12
    %p178 = scmp.lt.s32.totalorder %s12, 3
    %p179 = pnand %p177, %p178
    %p180 = pneg %p179
    // Predicated region
    $region9: #{tpu_custom_call.1} parent=5 // pred_check
      _
    $region10: #{tpu_custom_call.1} parent=5 // pred_check_branch
      %182 = sbr.rel (%p179) target = $region12
    $region11: #{tpu_custom_call.1} parent=5 // pred_region
      %s183 = ssub.s32 %s12, 1
      // Predicated region
      $region13: #{tpu_custom_call.1} parent=11 // pred_check
        %p184 = pneg %p59
      $region14: #{tpu_custom_call.1} parent=11 // pred_check_branch
        %186 = sbr.rel (%p184) target = $region16
      $region15: #{tpu_custom_call.1} parent=11 // pred_region
        _
      $region16: #{tpu_custom_call.1} parent=11 // pred_fallthru
        _
      // Predicated region
      $region17: #{tpu_custom_call.1} parent=11 // pred_check
        %p187 = pneg %p80
      $region18: #{tpu_custom_call.1} parent=11 // pred_check_branch
        %189 = sbr.rel (%p187) target = $region20
      $region19: #{tpu_custom_call.1} parent=11 // pred_region
        _
      $region20: #{tpu_custom_call.1} parent=11 // pred_fallthru
        _
      // Predicated region
      $region21: #{tpu_custom_call.1} parent=11 // pred_check
        %p190 = pneg %p101
      $region22: #{tpu_custom_call.1} parent=11 // pred_check_branch
        %192 = sbr.rel (%p190) target = $region24
      $region23: #{tpu_custom_call.1} parent=11 // pred_region
        _
      $region24: #{tpu_custom_call.1} parent=11 // pred_fallthru
        _
      // Predicated region
      $region25: #{tpu_custom_call.1} parent=11 // pred_check
        %p193 = pneg %p122
      $region26: #{tpu_custom_call.1} parent=11 // pred_check_branch
        %195 = sbr.rel (%p193) target = $region28
      $region27: #{tpu_custom_call.1} parent=11 // pred_region
        _
      $region28: #{tpu_custom_call.1} parent=11 // pred_fallthru
        _
      // Predicated region
      $region29: #{tpu_custom_call.1} parent=11 // pred_check
        %p196 = pneg %p143
      $region30: #{tpu_custom_call.1} parent=11 // pred_check_branch
        %198 = sbr.rel (%p196) target = $region32
      $region31: #{tpu_custom_call.1} parent=11 // pred_region
        _
      $region32: #{tpu_custom_call.1} parent=11 // pred_fallthru
        _
    $region12: #{tpu_custom_call.1} parent=5 // pred_fallthru
      _
    %p199 = scmp.lt.s32.totalorder %s12, 2
    // Predicated region
    $region33: #{tpu_custom_call.1} parent=5 // pred_check
      %p200 = pneg %p199
    $region34: #{tpu_custom_call.1} parent=5 // pred_check_branch
      %202 = sbr.rel (%p200) target = $region36
    $region35: #{tpu_custom_call.1} parent=5 // pred_region
      // Predicated region
      $region37: #{tpu_custom_call.1} parent=35 // pred_check
        %p203 = pneg %p32
      $region38: #{tpu_custom_call.1} parent=35 // pred_check_branch
        %205 = sbr.rel (%p203) target = $region40
      $region39: #{tpu_custom_call.1} parent=35 // pred_region
        %p206 = scmp.lt.s32.totalorder %s12, 1
        %s207 = scalar_select %p206, %s12, 1
        %s208 = smul.addr %s207, 2
        %s209 = smul.addr %s208, 8
        %s210 = scalar_lea.vmem %s0, %s209
      $region40: #{tpu_custom_call.1} parent=35 // pred_fallthru
        _
    $region36: #{tpu_custom_call.1} parent=5 // pred_fallthru
      _
    %p211 = scmp.le.s32.totalorder 1, %s12
    %p212 = scmp.lt.s32.totalorder %s12, 3
    %p213 = pnand %p211, %p212
    %p214 = pneg %p213
    // Predicated region
    $region41: #{tpu_custom_call.1} parent=5 // pred_check
      _
    $region42: #{tpu_custom_call.1} parent=5 // pred_check_branch
      %216 = sbr.rel (%p213) target = $region44
    $region43: #{tpu_custom_call.1} parent=5 // pred_region
      %s217 = ssub.s32 %s12, 1
      %p218 = scmp.lt.s32.totalorder %s17, 1
      %s219 = scalar_select %p218, %s17, 1
      %s220 = smul.addr %s219, 2
      %s221 = smul.addr %s220, 8
      %s222 = scalar_lea.vmem %s0, %s221
      %p223 = pneg %p38
      %p224 = pneg %p35
      %p225 = pneg %p59
      %p226 = pneg %p56
      %p227 = pneg %p80
      %p228 = pneg %p77
      %p229 = pneg %p101
      %p230 = pneg %p98
      %p231 = pneg %p122
      %p232 = pneg %p119
      %p233 = pneg %p143
      %p234 = pneg %p140
      %p235 = pneg %p169
      %p236 = pneg %p166
      %p237 = scmp.lt.s32.totalorder %s17, 1
      %s238 = scalar_select %p237, %s17, 1
      %s239 = smul.addr %s238, 2
      %s240 = smul.addr %s239, 8
      %s241 = scalar_lea.vmem %s6, %s240
      %p242 = scmp.lt.s32.totalorder %s17, 1
      %s243 = scalar_select %p242, %s17, 1
      %s244 = smul.addr %s243, 2
      %s245 = smul.addr %s244, 8
      %s246 = scalar_lea.vmem %s0, %s245
      %p247 = scmp.lt.s32.totalorder %s17, 1
      %s248 = scalar_select %p247, %s17, 1
      %s249 = smul.addr %s248, 2
      %s250 = smul.addr %s249, 8
      %s251 = scalar_lea.vmem %s6, %s250
      %v252 = vld [vmem:[%s1] sm:$0xff]
      %v253 = vld [vmem:[%s1 + $0x8] sm:$0xff]
      %v254 = vld [vmem:[%s4] sm:$0x1]
      %v255 = vld [vmem:[%s5] sm:$0x1]
      %vm256 = vcmask 64512
      %v257 = vsel %vm256, %v252, 0.0
      %258 = vadd.xlane.f32.xlu0 %v257
      %v259 = vpop.xlane.xlu0 %258
      %v260 = vsel %vm256, %v253, 0.0
      %261 = vadd.xlane.f32.xlu0 %v260
      %v262 = vpop.xlane.xlu0 %261
      %v263 = vrcp.pop 8.0
      %v264 = vmul.f32 %v259, %v263
      %v265 = vmul.f32 %v262, %v263
      %v266 = vsub.f32 %v252, %v264
      %v267 = vsub.f32 %v253, %v265
      %v268 = vmul.f32 %v266, %v266
      %v269 = vmul.f32 %v267, %v267
      %v270 = vsel %vm256, %v268, 0.0
      %271 = vadd.xlane.f32.xlu0 %v270
      %v272 = vpop.xlane.xlu0 %271
      %v273 = vsel %vm256, %v269, 0.0
      %274 = vadd.xlane.f32.xlu0 %v273
      %v275 = vpop.xlane.xlu0 %274
      %v276 = vmul.f32 %v272, %v263
      %v277 = vmul.f32 %v275, %v263
      %v278 = vadd.f32 %v276, 1e-12
      %v279 = vadd.f32 %v277, 1e-12
      %v280 = vrsqrt.pop %v278
      %v281 = vrsqrt.pop %v279
      %v282 = vmul.f32 %v266, %v280
      %v283 = vmul.f32 %v267, %v281
      %v285 = vlaneseq
      %v286 = vshrl.u32 %v285, 7
      %v287 = vsub.s32 0, %v286
      %v288 = vrot.slane %v254, %v287
      %v290 = vmul.f32 %v282, %v288
      %v291 = vmul.f32 %v283, %v288
      %v293 = vlaneseq
      %v294 = vshrl.u32 %v293, 7
      %v295 = vsub.s32 0, %v294
      %v296 = vrot.slane %v255, %v295
      %v298 = vadd.f32 %v290, %v296
      %v299 = vadd.f32 %v291, %v296
      %v301 = vsel %vm256, %v298, 0
      %v304 = vsel %vm256, %v299, 0
      %306 = vmatprep.subr.mxu0 0.0
      %307 = vmatpush1.xpose.msra.mxu0 %v301
      %308 = vmatprep.subr.mxu0 0.0
      %309 = vmatpush1.xpose.msra.mxu0 %v304
      %310 = vmatprep.subr.mxu0 0.0
      %311 = vmatpush1.xpose.msra.mxu0 0.0
      %312 = vmatprep.subr.mxu0 0.0
      %313 = vmatpush1.xpose.msra.mxu0 0.0
      %314 = vmatprep.subr.mxu0 0.0
      %315 = vmatpush1.xpose.msra.mxu0 0.0
      %316 = vmatprep.subr.mxu0 0.0
      %317 = vmatpush1.xpose.msra.mxu0 0.0
      %318 = vmatprep.subr.mxu0 0.0
      %319 = vmatpush1.xpose.msra.mxu0 0.0
      %320 = vmatprep.subr.mxu0 0.0
      %321 = vmatpush1.xpose.msra.mxu0 0.0
      %322 = vmatprep.subr.mxu0 0.0
      %323 = vmatpush1.xpose.msra.mxu0 0.0
      %324 = vmatprep.subr.mxu0 0.0
      %325 = vmatpush1.xpose.msra.mxu0 0.0
      %326 = vmatprep.subr.mxu0 0.0
      %327 = vmatpush1.xpose.msra.mxu0 0.0
      %328 = vmatprep.subr.mxu0 0.0
      %329 = vmatpush1.xpose.msra.mxu0 0.0
      %330 = vmatprep.subr.mxu0 0.0
      %331 = vmatpush1.xpose.msra.mxu0 0.0
      %332 = vmatprep.subr.mxu0 0.0
      %333 = vmatpush1.xpose.msra.mxu0 0.0
      %334 = vmatprep.subr.mxu0 0.0
      %335 = vmatpush1.xpose.msra.mxu0 0.0
      %336 = vmatprep.subr.mxu0 0.0
      %337 = vmatpush1.xpose.msra.mxu0 0.0
      %338 = vmatprep.subr.mxu0 0.0
      %339 = vmatpush1.xpose.msra.mxu0 0.0
      %340 = vmatprep.subr.mxu0 0.0
      %341 = vmatpush1.xpose.msra.mxu0 0.0
      %342 = vmatprep.subr.mxu0 0.0
      %343 = vmatpush1.xpose.msra.mxu0 0.0
      %344 = vmatprep.subr.mxu0 0.0
      %345 = vmatpush1.xpose.msra.mxu0 0.0
      %346 = vmatprep.subr.mxu0 0.0
      %347 = vmatpush1.xpose.msra.mxu0 0.0
      %348 = vmatprep.subr.mxu0 0.0
      %349 = vmatpush1.xpose.msra.mxu0 0.0
      %350 = vmatprep.subr.mxu0 0.0
      %351 = vmatpush1.xpose.msra.mxu0 0.0
      %352 = vmatprep.subr.mxu0 0.0
      %353 = vmatpush1.xpose.msra.mxu0 0.0
      %354 = vmatprep.subr.mxu0 0.0
      %355 = vmatpush1.xpose.msra.mxu0 0.0
      %356 = vmatprep.subr.mxu0 0.0
      %357 = vmatpush1.xpose.msra.mxu0 0.0
      %358 = vmatprep.subr.mxu0 0.0
      %359 = vmatpush1.xpose.msra.mxu0 0.0
      %360 = vmatprep.subr.mxu0 0.0
      %361 = vmatpush1.xpose.msra.mxu0 0.0
      %362 = vmatprep.subr.mxu0 0.0
      %363 = vmatpush1.xpose.msra.mxu0 0.0
      %364 = vmatprep.subr.mxu0 0.0
      %365 = vmatpush1.xpose.msra.mxu0 0.0
      %366 = vmatprep.subr.mxu0 0.0
      %367 = vmatpush1.xpose.msra.mxu0 0.0
      %368 = vmatprep.subr.mxu0 0.0
      %369 = vmatpush1.xpose.msra.mxu0 0.0
      %370 = vmatprep.mubr.f32.mxu0 0.0
      %371 = vmatmul.mubr.f32.gmra.mrb[0].mxu0 %v301
      %v372 = vpop.f32.mrb[0].mxu0
      %v373 = vadd.f32 0.0, %v372
      %v374 = vpop.f32.mrb[0].mxu0
      %375 = vmatprep.mubr.f32.mxu0 0.0
      %376 = vmatmul.mubr.f32.gmra.mrb[0].mxu0 %v304
      %v377 = vpop.f32.mrb[0].mxu0
      %v378 = vadd.f32 0.0, %v377
      %v379 = vpop.f32.mrb[0].mxu0
      %380 = vdwg.mxu0
      %v381 = vmax.f32 %v373, 0.0
      %v382 = vmax.f32 %v378, 0.0
      %vm383 = vcmask 130048
      %v384 = vsel %vm383, %v381, -inf
      %385 = vmax.xlane.f32.xlu0 %v384
      %v386 = vpop.xlane.xlu0 %385
      %v387 = vsel %vm383, %v382, -inf
      %388 = vmax.xlane.f32.xlu0 %v387
      %v389 = vpop.xlane.xlu0 %388
      %v390 = vsub.f32 %v381, %v386
      %v391 = vsub.f32 %v382, %v389
      %v392 = vmul.f32 %v390, 1.442695
      %v393 = vpow.pop %v392
      %v394 = vmul.f32 %v391, 1.442695
      %v395 = vpow.pop %v394
      %v396 = vsel %vm383, %v393, 0.0
      %397 = vadd.xlane.f32.xlu0 %v396
      %v398 = vpop.xlane.xlu0 %397
      %v399 = vsel %vm383, %v395, 0.0
      %400 = vadd.xlane.f32.xlu0 %v399
      %v401 = vpop.xlane.xlu0 %400
      %v402 = vrcp.pop %v398
      %v403 = vmul.f32 %v393, %v402
      %v404 = vrcp.pop %v401
      %v405 = vmul.f32 %v395, %v404
      %v406 = vld [vmem:[%s246] sm:$0xff]
      %v407 = vld [vmem:[%s246 + $0x8] sm:$0xff]
      %v409 = vsel %vm383, %v403, 0
      %v412 = vsel %vm383, %v405, 0
      %414 = vmatprep.subr.mxu0 0.0
      %415 = vmatpush1.msra.mxu0 %v406
      %416 = vmatprep.subr.mxu0 0.0
      %417 = vmatpush1.msra.mxu0 %v407
      %418 = vmatprep.subr.mxu0 0.0
      %419 = vmatpush1.msra.mxu0 0.0
      %420 = vmatprep.subr.mxu0 0.0
      %421 = vmatpush1.msra.mxu0 0.0
      %422 = vmatprep.subr.mxu0 0.0
      %423 = vmatpush1.msra.mxu0 0.0
      %424 = vmatprep.subr.mxu0 0.0
      %425 = vmatpush1.msra.mxu0 0.0
      %426 = vmatprep.subr.mxu0 0.0
      %427 = vmatpush1.msra.mxu0 0.0
      %428 = vmatprep.subr.mxu0 0.0
      %429 = vmatpush1.msra.mxu0 0.0
      %430 = vmatprep.subr.mxu0 0.0
      %431 = vmatpush1.msra.mxu0 0.0
      %432 = vmatprep.subr.mxu0 0.0
      %433 = vmatpush1.msra.mxu0 0.0
      %434 = vmatprep.subr.mxu0 0.0
      %435 = vmatpush1.msra.mxu0 0.0
      %436 = vmatprep.subr.mxu0 0.0
      %437 = vmatpush1.msra.mxu0 0.0
      %438 = vmatprep.subr.mxu0 0.0
      %439 = vmatpush1.msra.mxu0 0.0
      %440 = vmatprep.subr.mxu0 0.0
      %441 = vmatpush1.msra.mxu0 0.0
      %442 = vmatprep.subr.mxu0 0.0
      %443 = vmatpush1.msra.mxu0 0.0
      %444 = vmatprep.subr.mxu0 0.0
      %445 = vmatpush1.msra.mxu0 0.0
      %446 = vmatprep.subr.mxu0 0.0
      %447 = vmatpush1.msra.mxu0 0.0
      %448 = vmatprep.subr.mxu0 0.0
      %449 = vmatpush1.msra.mxu0 0.0
      %450 = vmatprep.subr.mxu0 0.0
      %451 = vmatpush1.msra.mxu0 0.0
      %452 = vmatprep.subr.mxu0 0.0
      %453 = vmatpush1.msra.mxu0 0.0
      %454 = vmatprep.subr.mxu0 0.0
      %455 = vmatpush1.msra.mxu0 0.0
      %456 = vmatprep.subr.mxu0 0.0
      %457 = vmatpush1.msra.mxu0 0.0
      %458 = vmatprep.subr.mxu0 0.0
      %459 = vmatpush1.msra.mxu0 0.0
      %460 = vmatprep.subr.mxu0 0.0
      %461 = vmatpush1.msra.mxu0 0.0
      %462 = vmatprep.subr.mxu0 0.0
      %463 = vmatpush1.msra.mxu0 0.0
      %464 = vmatprep.subr.mxu0 0.0
      %465 = vmatpush1.msra.mxu0 0.0
      %466 = vmatprep.subr.mxu0 0.0
      %467 = vmatpush1.msra.mxu0 0.0
      %468 = vmatprep.subr.mxu0 0.0
      %469 = vmatpush1.msra.mxu0 0.0
      %470 = vmatprep.subr.mxu0 0.0
      %471 = vmatpush1.msra.mxu0 0.0
      %472 = vmatprep.subr.mxu0 0.0
      %473 = vmatpush1.msra.mxu0 0.0
      %474 = vmatprep.subr.mxu0 0.0
      %475 = vmatpush1.msra.mxu0 0.0
      %476 = vmatprep.subr.mxu0 0.0
      %477 = vmatpush1.msra.mxu0 0.0
      %478 = vmatprep.mubr.f32.mxu0 0.0
      %479 = vmatmul.mubr.f32.gmra.mrb[0].mxu0 %v409
      %v480 = vpop.f32.mrb[0].mxu0
      %v481 = vadd.f32 0.0, %v480
      %v482 = vpop.f32.mrb[0].mxu0
      %483 = vmatprep.mubr.f32.mxu0 0.0
      %484 = vmatmul.mubr.f32.gmra.mrb[0].mxu0 %v412
      %v485 = vpop.f32.mrb[0].mxu0
      %v486 = vadd.f32 0.0, %v485
      %v487 = vpop.f32.mrb[0].mxu0
      %488 = vdwg.mxu0
      %489 = vmatprep.subr.mxu0 0.0
      %490 = vmatpush1.msra.mxu0 %v481
      %491 = vmatprep.subr.mxu0 0.0
      %492 = vmatpush1.msra.mxu0 %v486
      %493 = vmatprep.subr.mxu0 0.0
      %494 = vmatpush1.msra.mxu0 0.0
      %495 = vmatprep.subr.mxu0 0.0
      %496 = vmatpush1.msra.mxu0 0.0
      %497 = vmatprep.subr.mxu0 0.0
      %498 = vmatpush1.msra.mxu0 0.0
      %499 = vmatprep.subr.mxu0 0.0
      %500 = vmatpush1.msra.mxu0 0.0
      %501 = vmatprep.subr.mxu0 0.0
      %502 = vmatpush1.msra.mxu0 0.0
      %503 = vmatprep.subr.mxu0 0.0
      %504 = vmatpush1.msra.mxu0 0.0
      %505 = vmatprep.subr.mxu0 0.0
      %506 = vmatpush1.msra.mxu0 0.0
      %507 = vmatprep.subr.mxu0 0.0
      %508 = vmatpush1.msra.mxu0 0.0
      %509 = vmatprep.subr.mxu0 0.0
      %510 = vmatpush1.msra.mxu0 0.0
      %511 = vmatprep.subr.mxu0 0.0
      %512 = vmatpush1.msra.mxu0 0.0
      %513 = vmatprep.subr.mxu0 0.0
      %514 = vmatpush1.msra.mxu0 0.0
      %515 = vmatprep.subr.mxu0 0.0
      %516 = vmatpush1.msra.mxu0 0.0
      %517 = vmatprep.subr.mxu0 0.0
      %518 = vmatpush1.msra.mxu0 0.0
      %519 = vmatprep.subr.mxu0 0.0
      %520 = vmatpush1.msra.mxu0 0.0
      %521 = vmatprep.subr.mxu0 0.0
      %522 = vmatpush1.msra.mxu0 0.0
      %523 = vmatprep.subr.mxu0 0.0
      %524 = vmatpush1.msra.mxu0 0.0
      %525 = vmatprep.subr.mxu0 0.0
      %526 = vmatpush1.msra.mxu0 0.0
      %527 = vmatprep.subr.mxu0 0.0
      %528 = vmatpush1.msra.mxu0 0.0
      %529 = vmatprep.subr.mxu0 0.0
      %530 = vmatpush1.msra.mxu0 0.0
      %531 = vmatprep.subr.mxu0 0.0
      %532 = vmatpush1.msra.mxu0 0.0
      %533 = vmatprep.subr.mxu0 0.0
      %534 = vmatpush1.msra.mxu0 0.0
      %535 = vmatprep.subr.mxu0 0.0
      %536 = vmatpush1.msra.mxu0 0.0
      %537 = vmatprep.subr.mxu0 0.0
      %538 = vmatpush1.msra.mxu0 0.0
      %539 = vmatprep.subr.mxu0 0.0
      %540 = vmatpush1.msra.mxu0 0.0
      %541 = vmatprep.subr.mxu0 0.0
      %542 = vmatpush1.msra.mxu0 0.0
      %543 = vmatprep.subr.mxu0 0.0
      %544 = vmatpush1.msra.mxu0 0.0
      %545 = vmatprep.subr.mxu0 0.0
      %546 = vmatpush1.msra.mxu0 0.0
      %547 = vmatprep.subr.mxu0 0.0
      %548 = vmatpush1.msra.mxu0 0.0
      %549 = vmatprep.subr.mxu0 0.0
      %550 = vmatpush1.msra.mxu0 0.0
      %551 = vmatprep.subr.mxu0 0.0
      %552 = vmatpush1.msra.mxu0 0.0
      %553 = vmatprep.mubr.f32.mxu0 0.0
      %554 = vmatmul.mubr.f32.gmra.mrb[0].mxu0 %v409
      %v555 = vpop.f32.mrb[0].mxu0
      %v556 = vadd.f32 0.0, %v555
      %v557 = vpop.f32.mrb[0].mxu0
      %558 = vmatprep.mubr.f32.mxu0 0.0
      %559 = vmatmul.mubr.f32.gmra.mrb[0].mxu0 %v412
      %v560 = vpop.f32.mrb[0].mxu0
      %v561 = vadd.f32 0.0, %v560
      %v562 = vpop.f32.mrb[0].mxu0
      %563 = vdwg.mxu0
      %v564 = vmul.f32 %v556, 2.0
      %v565 = vmul.f32 %v561, 2.0
      %v566 = vsub.f32 %v564, %v406
      %v567 = vsub.f32 %v565, %v407
      %570 = vrot.lane.b32.xlu0 %v481, 4
      %v571 = vpop.permute.xlu0 %570
      %572 = vrot.lane.b32.xlu0 %v486, 4
      %v573 = vpop.permute.xlu0 %572
      %578 = vrot.lane.b32.xlu0 %v566, 8
      %v579 = vpop.permute.xlu0 %578
      %580 = vrot.lane.b32.xlu0 %v567, 8
      %v581 = vpop.permute.xlu0 %580
      %vm584 = vcmask 31744
      %v585 = vsel %vm584, %v406, %v571
      %v586 = vsel %vm584, %v407, %v573
      %v587 = vsel %vm256, %v585, %v579
      %v588 = vsel %vm256, %v586, %v581
      %v589 = vld [vmem:[%s2] sm:$0xff]
      %v590 = vld [vmem:[%s2 + $0x8] sm:$0xff]
      %v591 = vld [vmem:[%s2 + $0x10] sm:$0xff]
      %v592 = vld [vmem:[%s2 + $0x18] sm:$0xff]
      %v593 = vld [vmem:[%s2 + $0x20] sm:$0xff]
      %v594 = vld [vmem:[%s2 + $0x28] sm:$0xff]
      %v595 = vld [vmem:[%s2 + $0x30] sm:$0xff]
      %v596 = vld [vmem:[%s2 + $0x38] sm:$0xff]
      %v597 = vld [vmem:[%s2 + $0x40] sm:$0xff]
      %v598 = vld [vmem:[%s2 + $0x48] sm:$0xff]
      %v599 = vld [vmem:[%s2 + $0x50] sm:$0xff]
      %v600 = vld [vmem:[%s2 + $0x58] sm:$0xff]
      %v601 = vcombine.low %v589, %v591
      %v602 = vcombine.high %v589, %v591
      %v604 = vunpack.c.l.s4 1983009808
      %v605 = vunpack.c.0.s8 %v604
      %v606 = vlaneseq
      %v607 = vshrl.u32 %v606, 7
      %v608 = vsub.s32 %v605, %v607
      %v609 = vrot.slane %v601, %v608
      %v611 = vunpack.c.l.s4 1983009808
      %v612 = vunpack.c.0.s8 %v611
      %v613 = vlaneseq
      %v614 = vshrl.u32 %v613, 7
      %v615 = vsub.s32 %v612, %v614
      %v616 = vrot.slane %v602, %v615
      %v617 = vcombine.low %v590, %v592
      %v618 = vcombine.high %v590, %v592
      %v620 = vunpack.c.l.s4 1983009808
      %v621 = vunpack.c.0.s8 %v620
      %v622 = vlaneseq
      %v623 = vshrl.u32 %v622, 7
      %v624 = vsub.s32 %v621, %v623
      %v625 = vrot.slane %v617, %v624
      %v627 = vunpack.c.l.s4 1983009808
      %v628 = vunpack.c.0.s8 %v627
      %v629 = vlaneseq
      %v630 = vshrl.u32 %v629, 7
      %v631 = vsub.s32 %v628, %v630
      %v632 = vrot.slane %v618, %v631
      %v633 = vcombine.low %v593, %v595
      %v634 = vcombine.high %v593, %v595
      %v636 = vunpack.c.l.s4 1983009808
      %v637 = vunpack.c.0.s8 %v636
      %v638 = vlaneseq
      %v639 = vshrl.u32 %v638, 7
      %v640 = vsub.s32 %v637, %v639
      %v641 = vrot.slane %v633, %v640
      %v643 = vunpack.c.l.s4 1983009808
      %v644 = vunpack.c.0.s8 %v643
      %v645 = vlaneseq
      %v646 = vshrl.u32 %v645, 7
      %v647 = vsub.s32 %v644, %v646
      %v648 = vrot.slane %v634, %v647
      %v649 = vcombine.low %v594, %v596
      %v650 = vcombine.high %v594, %v596
      %v652 = vunpack.c.l.s4 1983009808
      %v653 = vunpack.c.0.s8 %v652
      %v654 = vlaneseq
      %v655 = vshrl.u32 %v654, 7
      %v656 = vsub.s32 %v653, %v655
      %v657 = vrot.slane %v649, %v656
      %v659 = vunpack.c.l.s4 1983009808
      %v660 = vunpack.c.0.s8 %v659
      %v661 = vlaneseq
      %v662 = vshrl.u32 %v661, 7
      %v663 = vsub.s32 %v660, %v662
      %v664 = vrot.slane %v650, %v663
      %v665 = vcombine.low %v609, %v625
      %v666 = vcombine.high %v609, %v625
      %v668 = vunpack.c.l.s4 1934713408
      %v669 = vunpack.c.0.s8 %v668
      %v670 = vlaneseq
      %v671 = vshrl.u32 %v670, 7
      %v672 = vsub.s32 %v669, %v671
      %v673 = vrot.slane %v665, %v672
      %v675 = vunpack.c.l.s4 1934713408
      %v676 = vunpack.c.0.s8 %v675
      %v677 = vlaneseq
      %v678 = vshrl.u32 %v677, 7
      %v679 = vsub.s32 %v676, %v678
      %v680 = vrot.slane %v666, %v679
      %v681 = vcombine.low %v616, %v632
      %v682 = vcombine.high %v616, %v632
      %v684 = vunpack.c.l.s4 1934713408
      %v685 = vunpack.c.0.s8 %v684
      %v686 = vlaneseq
      %v687 = vshrl.u32 %v686, 7
      %v688 = vsub.s32 %v685, %v687
      %v689 = vrot.slane %v681, %v688
      %v691 = vunpack.c.l.s4 1934713408
      %v692 = vunpack.c.0.s8 %v691
      %v693 = vlaneseq
      %v694 = vshrl.u32 %v693, 7
      %v695 = vsub.s32 %v692, %v694
      %v696 = vrot.slane %v682, %v695
      %v697 = vcombine.low %v641, %v657
      %v698 = vcombine.high %v641, %v657
      %v700 = vunpack.c.l.s4 1934713408
      %v701 = vunpack.c.0.s8 %v700
      %v702 = vlaneseq
      %v703 = vshrl.u32 %v702, 7
      %v704 = vsub.s32 %v701, %v703
      %v705 = vrot.slane %v697, %v704
      %v707 = vunpack.c.l.s4 1934713408
      %v708 = vunpack.c.0.s8 %v707
      %v709 = vlaneseq
      %v710 = vshrl.u32 %v709, 7
      %v711 = vsub.s32 %v708, %v710
      %v712 = vrot.slane %v698, %v711
      %v713 = vcombine.low %v648, %v664
      %v714 = vcombine.high %v648, %v664
      %v716 = vunpack.c.l.s4 1934713408
      %v717 = vunpack.c.0.s8 %v716
      %v718 = vlaneseq
      %v719 = vshrl.u32 %v718, 7
      %v720 = vsub.s32 %v717, %v719
      %v721 = vrot.slane %v713, %v720
      %v723 = vunpack.c.l.s4 1934713408
      %v724 = vunpack.c.0.s8 %v723
      %v725 = vlaneseq
      %v726 = vshrl.u32 %v725, 7
      %v727 = vsub.s32 %v724, %v726
      %v728 = vrot.slane %v714, %v727
      %v729 = vcombine.low %v673, %v705
      %v730 = vcombine.high %v673, %v705
      %v731 = vcombine.low %v680, %v712
      %v732 = vcombine.high %v680, %v712
      %v733 = vcombine.low %v689, %v721
      %v734 = vcombine.high %v689, %v721
      %v735 = vcombine.low %v696, %v728
      %v736 = vcombine.high %v696, %v728
      %v737 = vcombine.low %v597, %v599
      %v738 = vcombine.high %v597, %v599
      %v740 = vunpack.c.l.s4 1983009808
      %v741 = vunpack.c.0.s8 %v740
      %v742 = vlaneseq
      %v743 = vshrl.u32 %v742, 7
      %v744 = vsub.s32 %v741, %v743
      %v745 = vrot.slane %v737, %v744
      %v747 = vunpack.c.l.s4 1983009808
      %v748 = vunpack.c.0.s8 %v747
      %v749 = vlaneseq
      %v750 = vshrl.u32 %v749, 7
      %v751 = vsub.s32 %v748, %v750
      %v752 = vrot.slane %v738, %v751
      %v753 = vcombine.low %v598, %v600
      %v754 = vcombine.high %v598, %v600
      %v756 = vunpack.c.l.s4 1983009808
      %v757 = vunpack.c.0.s8 %v756
      %v758 = vlaneseq
      %v759 = vshrl.u32 %v758, 7
      %v760 = vsub.s32 %v757, %v759
      %v761 = vrot.slane %v753, %v760
      %v763 = vunpack.c.l.s4 1983009808
      %v764 = vunpack.c.0.s8 %v763
      %v765 = vlaneseq
      %v766 = vshrl.u32 %v765, 7
      %v767 = vsub.s32 %v764, %v766
      %v768 = vrot.slane %v754, %v767
      %v769 = vcombine.low %v745, %v761
      %v770 = vcombine.high %v745, %v761
      %v772 = vunpack.c.l.s4 1934713408
      %v773 = vunpack.c.0.s8 %v772
      %v774 = vlaneseq
      %v775 = vshrl.u32 %v774, 7
      %v776 = vsub.s32 %v773, %v775
      %v777 = vrot.slane %v769, %v776
      %v779 = vunpack.c.l.s4 1934713408
      %v780 = vunpack.c.0.s8 %v779
      %v781 = vlaneseq
      %v782 = vshrl.u32 %v781, 7
      %v783 = vsub.s32 %v780, %v782
      %v784 = vrot.slane %v770, %v783
      %v785 = vcombine.low %v752, %v768
      %v786 = vcombine.high %v752, %v768
      %v788 = vunpack.c.l.s4 1934713408
      %v789 = vunpack.c.0.s8 %v788
      %v790 = vlaneseq
      %v791 = vshrl.u32 %v790, 7
      %v792 = vsub.s32 %v789, %v791
      %v793 = vrot.slane %v785, %v792
      %v795 = vunpack.c.l.s4 1934713408
      %v796 = vunpack.c.0.s8 %v795
      %v797 = vlaneseq
      %v798 = vshrl.u32 %v797, 7
      %v799 = vsub.s32 %v796, %v798
      %v800 = vrot.slane %v786, %v799
      %v801 = vcombine.high %v777, 0.0
      %v802 = vcombine.high %v784, 0.0
      %v803 = vcombine.high %v793, 0.0
      %v804 = vcombine.high %v800, 0.0
      %807 = vrot.lane.b32.xlu0 %v730, 8
      %v808 = vpop.permute.xlu0 %807
      %809 = vrot.lane.b32.xlu0 %v801, 8
      %v810 = vpop.permute.xlu0 %809
      %815 = vrot.lane.b32.xlu0 %v731, 16
      %v816 = vpop.permute.xlu0 %815
      %817 = vrot.lane.b32.xlu0 %v784, 16
      %v818 = vpop.permute.xlu0 %817
      %823 = vrot.lane.b32.xlu0 %v732, 24
      %v824 = vpop.permute.xlu0 %823
      %825 = vrot.lane.b32.xlu0 %v802, 24
      %v826 = vpop.permute.xlu0 %825
      %831 = vrot.lane.b32.xlu0 %v733, 32
      %v832 = vpop.permute.xlu0 %831
      %833 = vrot.lane.b32.xlu0 %v793, 32
      %v834 = vpop.permute.xlu0 %833
      %839 = vrot.lane.b32.xlu0 %v734, 40
      %v840 = vpop.permute.xlu0 %839
      %841 = vrot.lane.b32.xlu0 %v803, 40
      %v842 = vpop.permute.xlu0 %841
      %847 = vrot.lane.b32.xlu0 %v735, 48
      %v848 = vpop.permute.xlu0 %847
      %849 = vrot.lane.b32.xlu0 %v800, 48
      %v850 = vpop.permute.xlu0 %849
      %855 = vrot.lane.b32.xlu0 %v736, 56
      %v856 = vpop.permute.xlu0 %855
      %857 = vrot.lane.b32.xlu0 %v804, 56
      %v858 = vpop.permute.xlu0 %857
      %v861 = vsel %vm256, %v729, %v808
      %v862 = vsel %vm256, %v777, %v810
      %v863 = vsel %vm383, %v861, %v816
      %v864 = vsel %vm383, %v862, %v818
      %vm865 = vcmask 195584
      %v866 = vsel %vm865, %v863, %v824
      %v867 = vsel %vm865, %v864, %v826
      %vm868 = vcmask 261120
      %v869 = vsel %vm868, %v866, %v832
      %v870 = vsel %vm868, %v867, %v834
      %vm871 = vcmask 326656
      %v872 = vsel %vm871, %v869, %v840
      %v873 = vsel %vm871, %v870, %v842
      %vm874 = vcmask 392192
      %v875 = vsel %vm874, %v872, %v848
      %v876 = vsel %vm874, %v873, %v850
      %vm877 = vcmask 457728
      %v878 = vsel %vm877, %v875, %v856
      %v879 = vsel %vm877, %v876, %v858
      %v880 = vcombine.low 0.0, 0.0
      %v881 = vcombine.high 0.0, 0.0
      %v883 = vunpack.c.l.s4 1983009808
      %v884 = vunpack.c.0.s8 %v883
      %v885 = vlaneseq
      %v886 = vshrl.u32 %v885, 7
      %v887 = vsub.s32 %v884, %v886
      %v888 = vrot.slane %v880, %v887
      %v890 = vunpack.c.l.s4 1983009808
      %v891 = vunpack.c.0.s8 %v890
      %v892 = vlaneseq
      %v893 = vshrl.u32 %v892, 7
      %v894 = vsub.s32 %v891, %v893
      %v895 = vrot.slane %v881, %v894
      %v896 = vcombine.low %v888, %v888
      %v897 = vcombine.high %v888, %v888
      %v899 = vunpack.c.l.s4 1934713408
      %v900 = vunpack.c.0.s8 %v899
      %v901 = vlaneseq
      %v902 = vshrl.u32 %v901, 7
      %v903 = vsub.s32 %v900, %v902
      %v904 = vrot.slane %v896, %v903
      %v906 = vunpack.c.l.s4 1934713408
      %v907 = vunpack.c.0.s8 %v906
      %v908 = vlaneseq
      %v909 = vshrl.u32 %v908, 7
      %v910 = vsub.s32 %v907, %v909
      %v911 = vrot.slane %v897, %v910
      %v912 = vcombine.low %v895, %v895
      %v913 = vcombine.high %v895, %v895
      %v915 = vunpack.c.l.s4 1934713408
      %v916 = vunpack.c.0.s8 %v915
      %v917 = vlaneseq
      %v918 = vshrl.u32 %v917, 7
      %v919 = vsub.s32 %v916, %v918
      %v920 = vrot.slane %v912, %v919
      %v922 = vunpack.c.l.s4 1934713408
      %v923 = vunpack.c.0.s8 %v922
      %v924 = vlaneseq
      %v925 = vshrl.u32 %v924, 7
      %v926 = vsub.s32 %v923, %v925
      %v927 = vrot.slane %v913, %v926
      %v928 = vcombine.low %v904, %v904
      %v929 = vcombine.high %v904, %v904
      %v930 = vcombine.low %v911, %v911
      %v931 = vcombine.high %v911, %v911
      %v932 = vcombine.low %v920, %v920
      %v933 = vcombine.high %v920, %v920
      %v934 = vcombine.low %v927, %v927
      %v935 = vcombine.high %v927, %v927
      %937 = vrot.lane.b32.xlu0 %v929, 8
      %v938 = vpop.permute.xlu0 %937
      %941 = vrot.lane.b32.xlu0 %v930, 16
      %v942 = vpop.permute.xlu0 %941
      %945 = vrot.lane.b32.xlu0 %v931, 24
      %v946 = vpop.permute.xlu0 %945
      %949 = vrot.lane.b32.xlu0 %v932, 32
      %v950 = vpop.permute.xlu0 %949
      %953 = vrot.lane.b32.xlu0 %v933, 40
      %v954 = vpop.permute.xlu0 %953
      %957 = vrot.lane.b32.xlu0 %v934, 48
      %v958 = vpop.permute.xlu0 %957
      %961 = vrot.lane.b32.xlu0 %v935, 56
      %v962 = vpop.permute.xlu0 %961
      %v964 = vsel %vm256, %v928, %v938
      %v965 = vsel %vm383, %v964, %v942
      %v966 = vsel %vm865, %v965, %v946
      %v967 = vsel %vm868, %v966, %v950
      %v968 = vsel %vm871, %v967, %v954
      %v969 = vsel %vm874, %v968, %v958
      %v970 = vsel %vm877, %v969, %v962
      %vm971 = vcmask 97280
      %v973 = vsel %vm971, %v587, 0
      %v976 = vsel %vm971, %v588, 0
      %vm978 = vcmask 1043456
      %v980 = vsel %vm978, %v879, 0
      %982 = vmatprep.subr.mxu0 0.0
      %983 = vmatpush1.msra.mxu0 %v878
      %984 = vmatprep.subr.mxu0 0.0
      %985 = vmatpush1.msra.mxu0 %v980
      %986 = vmatprep.subr.mxu0 0.0
      %987 = vmatpush1.msra.mxu0 0.0
      %988 = vmatprep.subr.mxu0 0.0
      %989 = vmatpush1.msra.mxu0 0.0
      %990 = vmatprep.subr.mxu0 0.0
      %991 = vmatpush1.msra.mxu0 0.0
      %992 = vmatprep.subr.mxu0 0.0
      %993 = vmatpush1.msra.mxu0 0.0
      %994 = vmatprep.subr.mxu0 0.0
      %995 = vmatpush1.msra.mxu0 0.0
      %996 = vmatprep.subr.mxu0 0.0
      %997 = vmatpush1.msra.mxu0 0.0
      %998 = vmatprep.subr.mxu0 0.0
      %999 = vmatpush1.msra.mxu0 0.0
      %1000 = vmatprep.subr.mxu0 0.0
      %1001 = vmatpush1.msra.mxu0 0.0
      %1002 = vmatprep.subr.mxu0 0.0
      %1003 = vmatpush1.msra.mxu0 0.0
      %1004 = vmatprep.subr.mxu0 0.0
      %1005 = vmatpush1.msra.mxu0 0.0
      %1006 = vmatprep.subr.mxu0 0.0
      %1007 = vmatpush1.msra.mxu0 0.0
      %1008 = vmatprep.subr.mxu0 0.0
      %1009 = vmatpush1.msra.mxu0 0.0
      %1010 = vmatprep.subr.mxu0 0.0
      %1011 = vmatpush1.msra.mxu0 0.0
      %1012 = vmatprep.subr.mxu0 0.0
      %1013 = vmatpush1.msra.mxu0 0.0
      %1014 = vmatprep.subr.mxu0 0.0
      %1015 = vmatpush1.msra.mxu0 0.0
      %1016 = vmatprep.subr.mxu0 0.0
      %1017 = vmatpush1.msra.mxu0 0.0
      %1018 = vmatprep.subr.mxu0 0.0
      %1019 = vmatpush1.msra.mxu0 0.0
      %1020 = vmatprep.subr.mxu0 0.0
      %1021 = vmatpush1.msra.mxu0 0.0
      %1022 = vmatprep.subr.mxu0 0.0
      %1023 = vmatpush1.msra.mxu0 0.0
      %1024 = vmatprep.subr.mxu0 0.0
      %1025 = vmatpush1.msra.mxu0 0.0
      %1026 = vmatprep.subr.mxu0 0.0
      %1027 = vmatpush1.msra.mxu0 0.0
      %1028 = vmatprep.subr.mxu0 0.0
      %1029 = vmatpush1.msra.mxu0 0.0
      %1030 = vmatprep.subr.mxu0 0.0
      %1031 = vmatpush1.msra.mxu0 0.0
      %1032 = vmatprep.subr.mxu0 0.0
      %1033 = vmatpush1.msra.mxu0 0.0
      %1034 = vmatprep.subr.mxu0 0.0
      %1035 = vmatpush1.msra.mxu0 0.0
      %1036 = vmatprep.subr.mxu0 0.0
      %1037 = vmatpush1.msra.mxu0 0.0
      %1038 = vmatprep.subr.mxu0 0.0
      %1039 = vmatpush1.msra.mxu0 0.0
      %1040 = vmatprep.subr.mxu0 0.0
      %1041 = vmatpush1.msra.mxu0 0.0
      %1042 = vmatprep.subr.mxu0 0.0
      %1043 = vmatpush1.msra.mxu0 0.0
      %1044 = vmatprep.subr.mxu0 0.0
      %1045 = vmatpush1.msra.mxu0 0.0
      %1046 = vmatprep.mubr.f32.mxu0 0.0
      %1047 = vmatmul.mubr.f32.gmra.mrb[0].mxu0 %v973
      %v1048 = vpop.f32.mrb[0].mxu0
      %v1049 = vadd.f32 %v970, %v1048
      %v1050 = vpop.f32.mrb[0].mxu0
      %1051 = vmatprep.mubr.f32.mxu0 0.0
      %1052 = vmatmul.mubr.f32.gmra.mrb[0].mxu0 %v976
      %v1053 = vpop.f32.mrb[0].mxu0
      %v1054 = vadd.f32 %v970, %v1053
      %v1055 = vpop.f32.mrb[0].mxu0
      %1056 = vdwg.mxu0
      %1059 = vrot.lane.b32.xlu0 %v1049, 120
      %v1060 = vpop.permute.xlu0 %1059
      %1061 = vrot.lane.b32.xlu0 %v1054, 120
      %v1062 = vpop.permute.xlu0 %1061
      %1065 = vrot.lane.b32.xlu0 %v1049, 112
      %v1066 = vpop.permute.xlu0 %1065
      %1067 = vrot.lane.b32.xlu0 %v1054, 112
      %v1068 = vpop.permute.xlu0 %1067
      %1071 = vrot.lane.b32.xlu0 %v1049, 104
      %v1072 = vpop.permute.xlu0 %1071
      %1073 = vrot.lane.b32.xlu0 %v1054, 104
      %v1074 = vpop.permute.xlu0 %1073
      %1077 = vrot.lane.b32.xlu0 %v1049, 96
      %v1078 = vpop.permute.xlu0 %1077
      %1079 = vrot.lane.b32.xlu0 %v1054, 96
      %v1080 = vpop.permute.xlu0 %1079
      %1083 = vrot.lane.b32.xlu0 %v1049, 88
      %v1084 = vpop.permute.xlu0 %1083
      %1085 = vrot.lane.b32.xlu0 %v1054, 88
      %v1086 = vpop.permute.xlu0 %1085
      %1089 = vrot.lane.b32.xlu0 %v1049, 80
      %v1090 = vpop.permute.xlu0 %1089
      %1091 = vrot.lane.b32.xlu0 %v1054, 80
      %v1092 = vpop.permute.xlu0 %1091
      %1095 = vrot.lane.b32.xlu0 %v1049, 72
      %v1096 = vpop.permute.xlu0 %1095
      %1097 = vrot.lane.b32.xlu0 %v1054, 72
      %v1098 = vpop.permute.xlu0 %1097
      %v1101 = vcombine.low %v1049, %v1066
      %v1102 = vcombine.high %v1049, %v1066
      %v1104 = vunpack.c.l.s4 1983009808
      %v1105 = vunpack.c.0.s8 %v1104
      %v1106 = vlaneseq
      %v1107 = vshrl.u32 %v1106, 7
      %v1108 = vsub.s32 %v1105, %v1107
      %v1109 = vrot.slane %v1101, %v1108
      %v1111 = vunpack.c.l.s4 1983009808
      %v1112 = vunpack.c.0.s8 %v1111
      %v1113 = vlaneseq
      %v1114 = vshrl.u32 %v1113, 7
      %v1115 = vsub.s32 %v1112, %v1114
      %v1116 = vrot.slane %v1102, %v1115
      %v1117 = vcombine.low %v1060, %v1072
      %v1118 = vcombine.high %v1060, %v1072
      %v1120 = vunpack.c.l.s4 1983009808
      %v1121 = vunpack.c.0.s8 %v1120
      %v1122 = vlaneseq
      %v1123 = vshrl.u32 %v1122, 7
      %v1124 = vsub.s32 %v1121, %v1123
      %v1125 = vrot.slane %v1117, %v1124
      %v1127 = vunpack.c.l.s4 1983009808
      %v1128 = vunpack.c.0.s8 %v1127
      %v1129 = vlaneseq
      %v1130 = vshrl.u32 %v1129, 7
      %v1131 = vsub.s32 %v1128, %v1130
      %v1132 = vrot.slane %v1118, %v1131
      %v1133 = vcombine.low %v1078, %v1090
      %v1134 = vcombine.high %v1078, %v1090
      %v1136 = vunpack.c.l.s4 1983009808
      %v1137 = vunpack.c.0.s8 %v1136
      %v1138 = vlaneseq
      %v1139 = vshrl.u32 %v1138, 7
      %v1140 = vsub.s32 %v1137, %v1139
      %v1141 = vrot.slane %v1133, %v1140
      %v1143 = vunpack.c.l.s4 1983009808
      %v1144 = vunpack.c.0.s8 %v1143
      %v1145 = vlaneseq
      %v1146 = vshrl.u32 %v1145, 7
      %v1147 = vsub.s32 %v1144, %v1146
      %v1148 = vrot.slane %v1134, %v1147
      %v1149 = vcombine.low %v1084, %v1096
      %v1150 = vcombine.high %v1084, %v1096
      %v1152 = vunpack.c.l.s4 1983009808
      %v1153 = vunpack.c.0.s8 %v1152
      %v1154 = vlaneseq
      %v1155 = vshrl.u32 %v1154, 7
      %v1156 = vsub.s32 %v1153, %v1155
      %v1157 = vrot.slane %v1149, %v1156
      %v1159 = vunpack.c.l.s4 1983009808
      %v1160 = vunpack.c.0.s8 %v1159
      %v1161 = vlaneseq
      %v1162 = vshrl.u32 %v1161, 7
      %v1163 = vsub.s32 %v1160, %v1162
      %v1164 = vrot.slane %v1150, %v1163
      %v1165 = vcombine.low %v1109, %v1125
      %v1166 = vcombine.high %v1109, %v1125
      %v1168 = vunpack.c.l.s4 1934713408
      %v1169 = vunpack.c.0.s8 %v1168
      %v1170 = vlaneseq
      %v1171 = vshrl.u32 %v1170, 7
      %v1172 = vsub.s32 %v1169, %v1171
      %v1173 = vrot.slane %v1165, %v1172
      %v1175 = vunpack.c.l.s4 1934713408
      %v1176 = vunpack.c.0.s8 %v1175
      %v1177 = vlaneseq
      %v1178 = vshrl.u32 %v1177, 7
      %v1179 = vsub.s32 %v1176, %v1178
      %v1180 = vrot.slane %v1166, %v1179
      %v1181 = vcombine.low %v1116, %v1132
      %v1182 = vcombine.high %v1116, %v1132
      %v1184 = vunpack.c.l.s4 1934713408
      %v1185 = vunpack.c.0.s8 %v1184
      %v1186 = vlaneseq
      %v1187 = vshrl.u32 %v1186, 7
      %v1188 = vsub.s32 %v1185, %v1187
      %v1189 = vrot.slane %v1181, %v1188
      %v1191 = vunpack.c.l.s4 1934713408
      %v1192 = vunpack.c.0.s8 %v1191
      %v1193 = vlaneseq
      %v1194 = vshrl.u32 %v1193, 7
      %v1195 = vsub.s32 %v1192, %v1194
      %v1196 = vrot.slane %v1182, %v1195
      %v1197 = vcombine.low %v1141, %v1157
      %v1198 = vcombine.high %v1141, %v1157
      %v1200 = vunpack.c.l.s4 1934713408
      %v1201 = vunpack.c.0.s8 %v1200
      %v1202 = vlaneseq
      %v1203 = vshrl.u32 %v1202, 7
      %v1204 = vsub.s32 %v1201, %v1203
      %v1205 = vrot.slane %v1197, %v1204
      %v1207 = vunpack.c.l.s4 1934713408
      %v1208 = vunpack.c.0.s8 %v1207
      %v1209 = vlaneseq
      %v1210 = vshrl.u32 %v1209, 7
      %v1211 = vsub.s32 %v1208, %v1210
      %v1212 = vrot.slane %v1198, %v1211
      %v1213 = vcombine.low %v1148, %v1164
      %v1214 = vcombine.high %v1148, %v1164
      %v1216 = vunpack.c.l.s4 1934713408
      %v1217 = vunpack.c.0.s8 %v1216
      %v1218 = vlaneseq
      %v1219 = vshrl.u32 %v1218, 7
      %v1220 = vsub.s32 %v1217, %v1219
      %v1221 = vrot.slane %v1213, %v1220
      %v1223 = vunpack.c.l.s4 1934713408
      %v1224 = vunpack.c.0.s8 %v1223
      %v1225 = vlaneseq
      %v1226 = vshrl.u32 %v1225, 7
      %v1227 = vsub.s32 %v1224, %v1226
      %v1228 = vrot.slane %v1214, %v1227
      %v1229 = vcombine.low %v1173, %v1205
      %v1230 = vcombine.high %v1173, %v1205
      %v1231 = vcombine.low %v1180, %v1212
      %v1232 = vcombine.high %v1180, %v1212
      %v1233 = vcombine.low %v1189, %v1221
      %v1234 = vcombine.high %v1189, %v1221
      %v1235 = vcombine.low %v1196, %v1228
      %v1236 = vcombine.high %v1196, %v1228
      %v1237 = vcombine.low %v1054, %v1068
      %v1238 = vcombine.high %v1054, %v1068
      %v1240 = vunpack.c.l.s4 1983009808
      %v1241 = vunpack.c.0.s8 %v1240
      %v1242 = vlaneseq
      %v1243 = vshrl.u32 %v1242, 7
      %v1244 = vsub.s32 %v1241, %v1243
      %v1245 = vrot.slane %v1237, %v1244
      %v1247 = vunpack.c.l.s4 1983009808
      %v1248 = vunpack.c.0.s8 %v1247
      %v1249 = vlaneseq
      %v1250 = vshrl.u32 %v1249, 7
      %v1251 = vsub.s32 %v1248, %v1250
      %v1252 = vrot.slane %v1238, %v1251
      %v1253 = vcombine.low %v1062, %v1074
      %v1254 = vcombine.high %v1062, %v1074
      %v1256 = vunpack.c.l.s4 1983009808
      %v1257 = vunpack.c.0.s8 %v1256
      %v1258 = vlaneseq
      %v1259 = vshrl.u32 %v1258, 7
      %v1260 = vsub.s32 %v1257, %v1259
      %v1261 = vrot.slane %v1253, %v1260
      %v1263 = vunpack.c.l.s4 1983009808
      %v1264 = vunpack.c.0.s8 %v1263
      %v1265 = vlaneseq
      %v1266 = vshrl.u32 %v1265, 7
      %v1267 = vsub.s32 %v1264, %v1266
      %v1268 = vrot.slane %v1254, %v1267
      %v1269 = vcombine.low %v1080, %v1092
      %v1270 = vcombine.high %v1080, %v1092
      %v1272 = vunpack.c.l.s4 1983009808
      %v1273 = vunpack.c.0.s8 %v1272
      %v1274 = vlaneseq
      %v1275 = vshrl.u32 %v1274, 7
      %v1276 = vsub.s32 %v1273, %v1275
      %v1277 = vrot.slane %v1269, %v1276
      %v1279 = vunpack.c.l.s4 1983009808
      %v1280 = vunpack.c.0.s8 %v1279
      %v1281 = vlaneseq
      %v1282 = vshrl.u32 %v1281, 7
      %v1283 = vsub.s32 %v1280, %v1282
      %v1284 = vrot.slane %v1270, %v1283
      %v1285 = vcombine.low %v1086, %v1098
      %v1286 = vcombine.high %v1086, %v1098
      %v1288 = vunpack.c.l.s4 1983009808
      %v1289 = vunpack.c.0.s8 %v1288
      %v1290 = vlaneseq
      %v1291 = vshrl.u32 %v1290, 7
      %v1292 = vsub.s32 %v1289, %v1291
      %v1293 = vrot.slane %v1285, %v1292
      %v1295 = vunpack.c.l.s4 1983009808
      %v1296 = vunpack.c.0.s8 %v1295
      %v1297 = vlaneseq
      %v1298 = vshrl.u32 %v1297, 7
      %v1299 = vsub.s32 %v1296, %v1298
      %v1300 = vrot.slane %v1286, %v1299
      %v1301 = vcombine.low %v1245, %v1261
      %v1302 = vcombine.high %v1245, %v1261
      %v1304 = vunpack.c.l.s4 1934713408
      %v1305 = vunpack.c.0.s8 %v1304
      %v1306 = vlaneseq
      %v1307 = vshrl.u32 %v1306, 7
      %v1308 = vsub.s32 %v1305, %v1307
      %v1309 = vrot.slane %v1301, %v1308
      %v1311 = vunpack.c.l.s4 1934713408
      %v1312 = vunpack.c.0.s8 %v1311
      %v1313 = vlaneseq
      %v1314 = vshrl.u32 %v1313, 7
      %v1315 = vsub.s32 %v1312, %v1314
      %v1316 = vrot.slane %v1302, %v1315
      %v1317 = vcombine.low %v1252, %v1268
      %v1318 = vcombine.high %v1252, %v1268
      %v1320 = vunpack.c.l.s4 1934713408
      %v1321 = vunpack.c.0.s8 %v1320
      %v1322 = vlaneseq
      %v1323 = vshrl.u32 %v1322, 7
      %v1324 = vsub.s32 %v1321, %v1323
      %v1325 = vrot.slane %v1317, %v1324
      %v1327 = vunpack.c.l.s4 1934713408
      %v1328 = vunpack.c.0.s8 %v1327
      %v1329 = vlaneseq
      %v1330 = vshrl.u32 %v1329, 7
      %v1331 = vsub.s32 %v1328, %v1330
      %v1332 = vrot.slane %v1318, %v1331
      %v1333 = vcombine.low %v1277, %v1293
      %v1334 = vcombine.high %v1277, %v1293
      %v1336 = vunpack.c.l.s4 1934713408
      %v1337 = vunpack.c.0.s8 %v1336
      %v1338 = vlaneseq
      %v1339 = vshrl.u32 %v1338, 7
      %v1340 = vsub.s32 %v1337, %v1339
      %v1341 = vrot.slane %v1333, %v1340
      %v1343 = vunpack.c.l.s4 1934713408
      %v1344 = vunpack.c.0.s8 %v1343
      %v1345 = vlaneseq
      %v1346 = vshrl.u32 %v1345, 7
      %v1347 = vsub.s32 %v1344, %v1346
      %v1348 = vrot.slane %v1334, %v1347
      %v1349 = vcombine.low %v1284, %v1300
      %v1350 = vcombine.high %v1284, %v1300
      %v1352 = vunpack.c.l.s4 1934713408
      %v1353 = vunpack.c.0.s8 %v1352
      %v1354 = vlaneseq
      %v1355 = vshrl.u32 %v1354, 7
      %v1356 = vsub.s32 %v1353, %v1355
      %v1357 = vrot.slane %v1349, %v1356
      %v1359 = vunpack.c.l.s4 1934713408
      %v1360 = vunpack.c.0.s8 %v1359
      %v1361 = vlaneseq
      %v1362 = vshrl.u32 %v1361, 7
      %v1363 = vsub.s32 %v1360, %v1362
      %v1364 = vrot.slane %v1350, %v1363
      %v1365 = vcombine.low %v1309, %v1341
      %v1366 = vcombine.high %v1309, %v1341
      %v1367 = vcombine.low %v1316, %v1348
      %v1368 = vcombine.high %v1316, %v1348
      %v1369 = vcombine.low %v1325, %v1357
      %v1370 = vcombine.high %v1325, %v1357
      %v1371 = vcombine.low %v1332, %v1364
      %v1372 = vcombine.high %v1332, %v1364
      %v1373 = vld [vmem:[%s3] sm:$0xff]
      %1374 = vmatprep.subr.mxu0 0.0
      %1375 = vmatpush1.msra.mxu0 %v1373
      %1376 = vmatprep.subr.mxu0 0.0
      %1377 = vmatpush1.msra.mxu0 0.0
      %1378 = vmatprep.subr.mxu0 0.0
      %1379 = vmatpush1.msra.mxu0 0.0
      %1380 = vmatprep.subr.mxu0 0.0
      %1381 = vmatpush1.msra.mxu0 0.0
      %1382 = vmatprep.subr.mxu0 0.0
      %1383 = vmatpush1.msra.mxu0 0.0
      %1384 = vmatprep.subr.mxu0 0.0
      %1385 = vmatpush1.msra.mxu0 0.0
      %1386 = vmatprep.subr.mxu0 0.0
      %1387 = vmatpush1.msra.mxu0 0.0
      %1388 = vmatprep.subr.mxu0 0.0
      %1389 = vmatpush1.msra.mxu0 0.0
      %1390 = vmatprep.subr.mxu0 0.0
      %1391 = vmatpush1.msra.mxu0 0.0
      %1392 = vmatprep.subr.mxu0 0.0
      %1393 = vmatpush1.msra.mxu0 0.0
      %1394 = vmatprep.subr.mxu0 0.0
      %1395 = vmatpush1.msra.mxu0 0.0
      %1396 = vmatprep.subr.mxu0 0.0
      %1397 = vmatpush1.msra.mxu0 0.0
      %1398 = vmatprep.subr.mxu0 0.0
      %1399 = vmatpush1.msra.mxu0 0.0
      %1400 = vmatprep.subr.mxu0 0.0
      %1401 = vmatpush1.msra.mxu0 0.0
      %1402 = vmatprep.subr.mxu0 0.0
      %1403 = vmatpush1.msra.mxu0 0.0
      %1404 = vmatprep.subr.mxu0 0.0
      %1405 = vmatpush1.msra.mxu0 0.0
      %1406 = vmatprep.subr.mxu0 0.0
      %1407 = vmatpush1.msra.mxu0 0.0
      %1408 = vmatprep.subr.mxu0 0.0
      %1409 = vmatpush1.msra.mxu0 0.0
      %1410 = vmatprep.subr.mxu0 0.0
      %1411 = vmatpush1.msra.mxu0 0.0
      %1412 = vmatprep.subr.mxu0 0.0
      %1413 = vmatpush1.msra.mxu0 0.0
      %1414 = vmatprep.subr.mxu0 0.0
      %1415 = vmatpush1.msra.mxu0 0.0
      %1416 = vmatprep.subr.mxu0 0.0
      %1417 = vmatpush1.msra.mxu0 0.0
      %1418 = vmatprep.subr.mxu0 0.0
      %1419 = vmatpush1.msra.mxu0 0.0
      %1420 = vmatprep.subr.mxu0 0.0
      %1421 = vmatpush1.msra.mxu0 0.0
      %1422 = vmatprep.subr.mxu0 0.0
      %1423 = vmatpush1.msra.mxu0 0.0
      %1424 = vmatprep.subr.mxu0 0.0
      %1425 = vmatpush1.msra.mxu0 0.0
      %1426 = vmatprep.subr.mxu0 0.0
      %1427 = vmatpush1.msra.mxu0 0.0
      %1428 = vmatprep.subr.mxu0 0.0
      %1429 = vmatpush1.msra.mxu0 0.0
      %1430 = vmatprep.subr.mxu0 0.0
      %1431 = vmatpush1.msra.mxu0 0.0
      %1432 = vmatprep.subr.mxu0 0.0
      %1433 = vmatpush1.msra.mxu0 0.0
      %1434 = vmatprep.subr.mxu0 0.0
      %1435 = vmatpush1.msra.mxu0 0.0
      %1436 = vmatprep.subr.mxu0 0.0
      %1437 = vmatpush1.msra.mxu0 0.0
      %1438 = vmatprep.mubr.f32.mxu0 0.0
      %1439 = vmatmul.mubr.f32.gmra.mrb[0].mxu0 %v301
      %v1440 = vpop.f32.mrb[0].mxu0
      %v1441 = vadd.f32 0.0, %v1440
      %v1442 = vpop.f32.mrb[0].mxu0
      %1443 = vmatprep.mubr.f32.mxu0 0.0
      %1444 = vmatmul.mubr.f32.gmra.mrb[0].mxu0 %v304
      %v1445 = vpop.f32.mrb[0].mxu0
      %v1446 = vadd.f32 0.0, %v1445
      %v1447 = vpop.f32.mrb[0].mxu0
      %1448 = vdwg.mxu0
      %v1449 = vlaneseq
      %v1450 = vshrl.u32 %v1449, 7
      %v1451 = vsub.s32 0, %v1450
      %v1452 = vrot.slane %v298, %v1451
      %1454 = vbcast.lane.b32.xlu0 %v1452, 256
      %v1455 = vpop.permute.xlu0 %1454
      %v1456 = vlaneseq
      %v1457 = vshrl.u32 %v1456, 7
      %v1458 = vsub.s32 1, %v1457
      %v1459 = vrot.slane %v298, %v1458
      %1461 = vbcast.lane.b32.xlu0 %v1459, 256
      %v1462 = vpop.permute.xlu0 %1461
      %v1463 = vlaneseq
      %v1464 = vshrl.u32 %v1463, 7
      %v1465 = vsub.s32 2, %v1464
      %v1466 = vrot.slane %v298, %v1465
      %1468 = vbcast.lane.b32.xlu0 %v1466, 256
      %v1469 = vpop.permute.xlu0 %1468
      %v1470 = vlaneseq
      %v1471 = vshrl.u32 %v1470, 7
      %v1472 = vsub.s32 3, %v1471
      %v1473 = vrot.slane %v298, %v1472
      %1475 = vbcast.lane.b32.xlu0 %v1473, 256
      %v1476 = vpop.permute.xlu0 %1475
      %v1477 = vlaneseq
      %v1478 = vshrl.u32 %v1477, 7
      %v1479 = vsub.s32 4, %v1478
      %v1480 = vrot.slane %v298, %v1479
      %1482 = vbcast.lane.b32.xlu0 %v1480, 256
      %v1483 = vpop.permute.xlu0 %1482
      %v1484 = vlaneseq
      %v1485 = vshrl.u32 %v1484, 7
      %v1486 = vsub.s32 5, %v1485
      %v1487 = vrot.slane %v298, %v1486
      %1489 = vbcast.lane.b32.xlu0 %v1487, 256
      %v1490 = vpop.permute.xlu0 %1489
      %v1491 = vlaneseq
      %v1492 = vshrl.u32 %v1491, 7
      %v1493 = vsub.s32 6, %v1492
      %v1494 = vrot.slane %v298, %v1493
      %1496 = vbcast.lane.b32.xlu0 %v1494, 256
      %v1497 = vpop.permute.xlu0 %1496
      %v1498 = vlaneseq
      %v1499 = vshrl.u32 %v1498, 7
      %v1500 = vsub.s32 7, %v1499
      %v1501 = vrot.slane %v298, %v1500
      %1503 = vbcast.lane.b32.xlu0 %v1501, 256
      %v1504 = vpop.permute.xlu0 %1503
      %v1505 = vlaneseq
      %v1506 = vshrl.u32 %v1505, 7
      %v1507 = vsub.s32 0, %v1506
      %v1508 = vrot.slane %v299, %v1507
      %1510 = vbcast.lane.b32.xlu0 %v1508, 256
      %v1511 = vpop.permute.xlu0 %1510
      %v1512 = vlaneseq
      %v1513 = vshrl.u32 %v1512, 7
      %v1514 = vsub.s32 1, %v1513
      %v1515 = vrot.slane %v299, %v1514
      %1517 = vbcast.lane.b32.xlu0 %v1515, 256
      %v1518 = vpop.permute.xlu0 %1517
      %v1519 = vlaneseq
      %v1520 = vshrl.u32 %v1519, 7
      %v1521 = vsub.s32 2, %v1520
      %v1522 = vrot.slane %v299, %v1521
      %1524 = vbcast.lane.b32.xlu0 %v1522, 256
      %v1525 = vpop.permute.xlu0 %1524
      %v1526 = vlaneseq
      %v1527 = vshrl.u32 %v1526, 7
      %v1528 = vsub.s32 3, %v1527
      %v1529 = vrot.slane %v299, %v1528
      %1531 = vbcast.lane.b32.xlu0 %v1529, 256
      %v1532 = vpop.permute.xlu0 %1531
      %v1533 = vlaneseq
      %v1534 = vshrl.u32 %v1533, 7
      %v1535 = vsub.s32 4, %v1534
      %v1536 = vrot.slane %v299, %v1535
      %1538 = vbcast.lane.b32.xlu0 %v1536, 256
      %v1539 = vpop.permute.xlu0 %1538
      %v1540 = vlaneseq
      %v1541 = vshrl.u32 %v1540, 7
      %v1542 = vsub.s32 5, %v1541
      %v1543 = vrot.slane %v299, %v1542
      %1545 = vbcast.lane.b32.xlu0 %v1543, 256
      %v1546 = vpop.permute.xlu0 %1545
      %v1547 = vlaneseq
      %v1548 = vshrl.u32 %v1547, 7
      %v1549 = vsub.s32 6, %v1548
      %v1550 = vrot.slane %v299, %v1549
      %1552 = vbcast.lane.b32.xlu0 %v1550, 256
      %v1553 = vpop.permute.xlu0 %1552
      %v1554 = vlaneseq
      %v1555 = vshrl.u32 %v1554, 7
      %v1556 = vsub.s32 7, %v1555
      %v1557 = vrot.slane %v299, %v1556
      %1559 = vbcast.lane.b32.xlu0 %v1557, 256
      %v1560 = vpop.permute.xlu0 %1559
      %v1561 = vmul.f32 %v1229, %v1455
      %v1562 = vmul.f32 %v1230, %v1462
      %v1563 = vmul.f32 %v1231, %v1469
      %v1564 = vmul.f32 %v1232, %v1476
      %v1565 = vmul.f32 %v1233, %v1483
      %v1566 = vmul.f32 %v1234, %v1490
      %v1567 = vmul.f32 %v1235, %v1497
      %v1568 = vmul.f32 %v1236, %v1504
      %v1569 = vmul.f32 %v1365, %v1511
      %v1570 = vmul.f32 %v1366, %v1518
      %v1571 = vmul.f32 %v1367, %v1525
      %v1572 = vmul.f32 %v1368, %v1532
      %v1573 = vmul.f32 %v1369, %v1539
      %v1574 = vmul.f32 %v1370, %v1546
      %v1575 = vmul.f32 %v1371, %v1553
      %v1576 = vmul.f32 %v1372, %v1560
      %v1577 = vsel %vm256, %v1561, 0.0
      %v1578 = vrot.slane %v1577, 4
      %v1579 = vadd.f32 %v1577, %v1578
      %v1580 = vrot.slane %v1579, 2
      %v1581 = vadd.f32 %v1579, %v1580
      %v1582 = vrot.slane %v1581, 1
      %v1583 = vadd.f32 %v1581, %v1582
      %v1584 = vsel %vm256, %v1562, 0.0
      %v1585 = vrot.slane %v1584, 4
      %v1586 = vadd.f32 %v1584, %v1585
      %v1587 = vrot.slane %v1586, 2
      %v1588 = vadd.f32 %v1586, %v1587
      %v1589 = vrot.slane %v1588, 1
      %v1590 = vadd.f32 %v1588, %v1589
      %v1591 = vsel %vm256, %v1563, 0.0
      %v1592 = vrot.slane %v1591, 4
      %v1593 = vadd.f32 %v1591, %v1592
      %v1594 = vrot.slane %v1593, 2
      %v1595 = vadd.f32 %v1593, %v1594
      %v1596 = vrot.slane %v1595, 1
      %v1597 = vadd.f32 %v1595, %v1596
      %v1598 = vsel %vm256, %v1564, 0.0
      %v1599 = vrot.slane %v1598, 4
      %v1600 = vadd.f32 %v1598, %v1599
      %v1601 = vrot.slane %v1600, 2
      %v1602 = vadd.f32 %v1600, %v1601
      %v1603 = vrot.slane %v1602, 1
      %v1604 = vadd.f32 %v1602, %v1603
      %v1605 = vsel %vm256, %v1565, 0.0
      %v1606 = vrot.slane %v1605, 4
      %v1607 = vadd.f32 %v1605, %v1606
      %v1608 = vrot.slane %v1607, 2
      %v1609 = vadd.f32 %v1607, %v1608
      %v1610 = vrot.slane %v1609, 1
      %v1611 = vadd.f32 %v1609, %v1610
      %v1612 = vsel %vm256, %v1566, 0.0
      %v1613 = vrot.slane %v1612, 4
      %v1614 = vadd.f32 %v1612, %v1613
      %v1615 = vrot.slane %v1614, 2
      %v1616 = vadd.f32 %v1614, %v1615
      %v1617 = vrot.slane %v1616, 1
      %v1618 = vadd.f32 %v1616, %v1617
      %v1619 = vsel %vm256, %v1567, 0.0
      %v1620 = vrot.slane %v1619, 4
      %v1621 = vadd.f32 %v1619, %v1620
      %v1622 = vrot.slane %v1621, 2
      %v1623 = vadd.f32 %v1621, %v1622
      %v1624 = vrot.slane %v1623, 1
      %v1625 = vadd.f32 %v1623, %v1624
      %v1626 = vsel %vm256, %v1568, 0.0
      %v1627 = vrot.slane %v1626, 4
      %v1628 = vadd.f32 %v1626, %v1627
      %v1629 = vrot.slane %v1628, 2
      %v1630 = vadd.f32 %v1628, %v1629
      %v1631 = vrot.slane %v1630, 1
      %v1632 = vadd.f32 %v1630, %v1631
      %v1633 = vsel %vm256, %v1569, 0.0
      %v1634 = vrot.slane %v1633, 4
      %v1635 = vadd.f32 %v1633, %v1634
      %v1636 = vrot.slane %v1635, 2
      %v1637 = vadd.f32 %v1635, %v1636
      %v1638 = vrot.slane %v1637, 1
      %v1639 = vadd.f32 %v1637, %v1638
      %v1640 = vsel %vm256, %v1570, 0.0
      %v1641 = vrot.slane %v1640, 4
      %v1642 = vadd.f32 %v1640, %v1641
      %v1643 = vrot.slane %v1642, 2
      %v1644 = vadd.f32 %v1642, %v1643
      %v1645 = vrot.slane %v1644, 1
      %v1646 = vadd.f32 %v1644, %v1645
      %v1647 = vsel %vm256, %v1571, 0.0
      %v1648 = vrot.slane %v1647, 4
      %v1649 = vadd.f32 %v1647, %v1648
      %v1650 = vrot.slane %v1649, 2
      %v1651 = vadd.f32 %v1649, %v1650
      %v1652 = vrot.slane %v1651, 1
      %v1653 = vadd.f32 %v1651, %v1652
      %v1654 = vsel %vm256, %v1572, 0.0
      %v1655 = vrot.slane %v1654, 4
      %v1656 = vadd.f32 %v1654, %v1655
      %v1657 = vrot.slane %v1656, 2
      %v1658 = vadd.f32 %v1656, %v1657
      %v1659 = vrot.slane %v1658, 1
      %v1660 = vadd.f32 %v1658, %v1659
      %v1661 = vsel %vm256, %v1573, 0.0
      %v1662 = vrot.slane %v1661, 4
      %v1663 = vadd.f32 %v1661, %v1662
      %v1664 = vrot.slane %v1663, 2
      %v1665 = vadd.f32 %v1663, %v1664
      %v1666 = vrot.slane %v1665, 1
      %v1667 = vadd.f32 %v1665, %v1666
      %v1668 = vsel %vm256, %v1574, 0.0
      %v1669 = vrot.slane %v1668, 4
      %v1670 = vadd.f32 %v1668, %v1669
      %v1671 = vrot.slane %v1670, 2
      %v1672 = vadd.f32 %v1670, %v1671
      %v1673 = vrot.slane %v1672, 1
      %v1674 = vadd.f32 %v1672, %v1673
      %v1675 = vsel %vm256, %v1575, 0.0
      %v1676 = vrot.slane %v1675, 4
      %v1677 = vadd.f32 %v1675, %v1676
      %v1678 = vrot.slane %v1677, 2
      %v1679 = vadd.f32 %v1677, %v1678
      %v1680 = vrot.slane %v1679, 1
      %v1681 = vadd.f32 %v1679, %v1680
      %v1682 = vsel %vm256, %v1576, 0.0
      %v1683 = vrot.slane %v1682, 4
      %v1684 = vadd.f32 %v1682, %v1683
      %v1685 = vrot.slane %v1684, 2
      %v1686 = vadd.f32 %v1684, %v1685
      %v1687 = vrot.slane %v1686, 1
      %v1688 = vadd.f32 %v1686, %v1687
      %v1691 = vrot.slane %v1441, 1
      %v1692 = vrot.slane %v1441, 2
      %v1693 = vrot.slane %v1441, 3
      %v1694 = vrot.slane %v1441, 4
      %v1695 = vrot.slane %v1441, 5
      %v1696 = vrot.slane %v1441, 6
      %v1697 = vrot.slane %v1441, 7
      %v1698 = vrot.slane %v1446, 1
      %v1699 = vrot.slane %v1446, 2
      %v1700 = vrot.slane %v1446, 3
      %v1701 = vrot.slane %v1446, 4
      %v1702 = vrot.slane %v1446, 5
      %v1703 = vrot.slane %v1446, 6
      %v1704 = vrot.slane %v1446, 7
      %v1721 = vadd.f32 %v1583, %v1441
      %v1722 = vadd.f32 %v1590, %v1691
      %v1723 = vadd.f32 %v1597, %v1692
      %v1724 = vadd.f32 %v1604, %v1693
      %v1725 = vadd.f32 %v1611, %v1694
      %v1726 = vadd.f32 %v1618, %v1695
      %v1727 = vadd.f32 %v1625, %v1696
      %v1728 = vadd.f32 %v1632, %v1697
      %v1729 = vadd.f32 %v1639, %v1446
      %v1730 = vadd.f32 %v1646, %v1698
      %v1731 = vadd.f32 %v1653, %v1699
      %v1732 = vadd.f32 %v1660, %v1700
      %v1733 = vadd.f32 %v1667, %v1701
      %v1734 = vadd.f32 %v1674, %v1702
      %v1735 = vadd.f32 %v1681, %v1703
      %v1736 = vadd.f32 %v1688, %v1704
      %v1753 = vrot.slane %v1722, 7
      %vm1754 = vcmask 1041409
      %v1755 = vsel %vm1754, %v1753, %v1721
      %v1756 = vrot.slane %v1723, 6
      %vm1757 = vcmask 1042434
      %v1758 = vsel %vm1757, %v1756, %v1755
      %v1759 = vrot.slane %v1724, 5
      %vm1760 = vcmask 1043459
      %v1761 = vsel %vm1760, %v1759, %v1758
      %v1762 = vrot.slane %v1725, 4
      %vm1763 = vcmask 1044484
      %v1764 = vsel %vm1763, %v1762, %v1761
      %v1765 = vrot.slane %v1726, 3
      %vm1766 = vcmask 1045509
      %v1767 = vsel %vm1766, %v1765, %v1764
      %v1768 = vrot.slane %v1727, 2
      %vm1769 = vcmask 1046534
      %v1770 = vsel %vm1769, %v1768, %v1767
      %v1771 = vrot.slane %v1728, 1
      %vm1772 = vcmask 1047559
      %v1773 = vsel %vm1772, %v1771, %v1770
      %v1774 = vrot.slane %v1730, 7
      %v1775 = vsel %vm1754, %v1774, %v1729
      %v1776 = vrot.slane %v1731, 6
      %v1777 = vsel %vm1757, %v1776, %v1775
      %v1778 = vrot.slane %v1732, 5
      %v1779 = vsel %vm1760, %v1778, %v1777
      %v1780 = vrot.slane %v1733, 4
      %v1781 = vsel %vm1763, %v1780, %v1779
      %v1782 = vrot.slane %v1734, 3
      %v1783 = vsel %vm1766, %v1782, %v1781
      %v1784 = vrot.slane %v1735, 2
      %v1785 = vsel %vm1769, %v1784, %v1783
      %v1786 = vrot.slane %v1736, 1
      %v1787 = vsel %vm1772, %v1786, %v1785
      %1790 = vst.msk [vmem:[%s251] sm:$0xff] %vm256, %v1773
      %1791 = vst.msk [vmem:[%s251 + $0x8] sm:$0xff] %vm256, %v1787
      %p1792 = scmp.lt.s32.totalorder %s17, 1
      %s1793 = scalar_select %p1792, %s17, 1
      %s1794 = smul.addr %s1793, 2
      %s1795 = smul.addr %s1794, 8
      %s1796 = scalar_lea.vmem %s6, %s1795
      // Predicated region
      $region45: #{tpu_custom_call.1} parent=43 // pred_check
        %p1797 = pneg %p166
      $region46: #{tpu_custom_call.1} parent=43 // pred_check_branch
        %1799 = sbr.rel (%p1797) target = $region48
      $region47: #{tpu_custom_call.1} parent=43 // pred_region
        _
      $region48: #{tpu_custom_call.1} parent=43 // pred_fallthru
        _
    $region44: #{tpu_custom_call.1} parent=5 // pred_fallthru
      _
    %p1800 = scmp.le.s32.totalorder 2, %s12
    // Predicated region
    $region49: #{tpu_custom_call.1} parent=5 // pred_check
      %p1801 = pneg %p1800
    $region50: #{tpu_custom_call.1} parent=5 // pred_check_branch
      %1803 = sbr.rel (%p1801) target = $region52
    $region51: #{tpu_custom_call.1} parent=5 // pred_region
      %s1804 = ssub.s32 %s12, 2
      // Predicated region
      $region53: #{tpu_custom_call.1} parent=51 // pred_check
        %p1805 = pneg %p172
      $region54: #{tpu_custom_call.1} parent=51 // pred_check_branch
        %1807 = sbr.rel (%p1805) target = $region56
      $region55: #{tpu_custom_call.1} parent=51 // pred_region
        %p1808 = scmp.lt.s32.totalorder %s18, 1
        %s1809 = scalar_select %p1808, %s18, 1
        %s1810 = smul.addr %s1809, 2
        %s1811 = smul.addr %s1810, 8
        %s1812 = scalar_lea.vmem %s6, %s1811
      $region56: #{tpu_custom_call.1} parent=51 // pred_fallthru
        _
    $region52: #{tpu_custom_call.1} parent=5 // pred_fallthru
      _
  $region6: #{tpu_custom_call.1} parent=0 // loop_footer
    %s16 = sadd.s32 1, %s12
  $region7: #{tpu_custom_call.1} parent=0 // loop_footer_branch
    %11 = sbr.rel target = $region3
  $region8: #{tpu_custom_call.1} parent=0 // loop_exit
    _

</llo_original>
